<compile_context>
chip_gen: v5e
topology: v5e:2x2
jax: 0.10.0
libtpu: 0.0.40
codegen_flags: <defaults>
</compile_context>

<pallas_src>
import functools
import math

import jax
import jax.numpy as jnp
from jax.experimental import pallas as pl
from jax.experimental.pallas import tpu as pltpu


# ---------------- configuration (small, consistent with the module) ----------------
BATCH = 2
SEQ = 8
HIDDEN = 32
NUM_HEADS = 4
NUM_KV_HEADS = 2
HEAD_DIM = HIDDEN // NUM_HEADS           # 8
KV_DIM = NUM_KV_HEADS * HEAD_DIM         # 16
N_REP = NUM_HEADS // NUM_KV_HEADS        # 2 (GQA repeat factor == repeat_kv)
RMS_EPS = 1e-6
NEG_BIG = -1e9                           # cross-batch additive mask; exp() underflows to 0


def _decoder_layer_kernel(x_ref, mask_ref, wqkv_ref, wo_ref, gamma_ref,
                          out_ref, norm_ref, attn_ref, *,
                          num_heads, num_kv_heads, head_dim):
    """Single invocation: whole layer for all batches. All math in fp32.

    x_ref     : (M, H)          M = B*S, hidden states (residual source)
    mask_ref  : (M, M)          block-diagonal additive mask (user mask on diag blocks)
    wqkv_ref  : (H, H + 2*KV)   fused [Wq | Wk | Wv], gamma pre-folded into the rows
    wo_ref    : (H, H)          output projection (in, out)
    gamma_ref : (1, H)          RMSNorm weight (for the returned normed tensor only)
    outputs   : hidden_out, normed, attn_out, each (M, H)
    """
    hidden = num_heads * head_dim
    kv_width = num_kv_heads * head_dim
    n_rep = num_heads // num_kv_heads
    f32 = jnp.float32
    DOT = dict(preferred_element_type=f32, precision=jax.lax.Precision.HIGHEST)

    x = x_ref[...].astype(f32)                             # (M, H)
    mask = mask_ref[...].astype(f32)                       # (M, M)

    # ---- LlamaRMSNorm (fp32) ----
    var = jnp.mean(x * x, axis=-1, keepdims=True)
    xr = x * jax.lax.rsqrt(var + RMS_EPS)                  # (M, H), un-scaled
    norm_ref[...] = (gamma_ref[...] * xr).astype(norm_ref.dtype)

    # ---- ONE fused QKV projection (gamma already folded into wqkv wrapper-side) ----
    qkv = jnp.dot(xr, wqkv_ref[...], **DOT)                # (M, H + 2*KV)

    scale = 1.0 / math.sqrt(head_dim)
    acc = jnp.zeros((x.shape[0], hidden), dtype=f32)       # fp32 attention-output accumulator
    for h in range(num_heads):
        j = h // n_rep                                      # GQA: kv head used by query head h
        q_h = qkv[:, h * head_dim:(h + 1) * head_dim]                              # (M, D)
        k_h = qkv[:, hidden + j * head_dim: hidden + (j + 1) * head_dim]           # (M, D)
        v_h = qkv[:, hidden + kv_width + j * head_dim:
                  hidden + kv_width + (j + 1) * head_dim]                          # (M, D)

        # Batch-folded scores: contract the last dims -> (M, M); no K transpose materialized.
        s = jax.lax.dot_general(q_h, k_h, (((1,), (1,)), ((), ())), **DOT)
        s = s * scale + mask

        # fp32 softmax (block-diagonal mask guarantees cross-batch terms underflow to 0).
        m = jnp.max(s, axis=-1, keepdims=True)
        p = jnp.exp(s - m)
        p = p / jnp.sum(p, axis=-1, keepdims=True)          # exact divide on (M,1) denominator

        o_h = jnp.dot(p, v_h, **DOT)                        # (M, D)
        # Sublane-aligned wo row slice; accumulate instead of lane-axis head concat.
        acc = acc + jnp.dot(o_h, wo_ref[h * head_dim:(h + 1) * head_dim, :], **DOT)

    attn_ref[...] = acc.astype(attn_ref.dtype)
    out_ref[...] = (x + acc).astype(out_ref.dtype)          # residual add in-kernel


@jax.jit
def suma_decoder_layer(hidden_states, attention_mask, wq, wk, wv, wo, rms_weight):
    """Returns (hidden_states_out, normed_states, attn_output) -- the module's
    `hidden_states` plus its `internal_states` [post-layernorm, post-attention].

    hidden_states: (B, S, H); attention_mask: additive (B, 1, S, S);
    wq/wk/wv/wo stored as (in_features, out_features); rms_weight: (H,).
    """
    B, S, H = hidden_states.shape
    nh, nkv, d = NUM_HEADS, NUM_KV_HEADS, HEAD_DIM
    M = B * S

    x2d = hidden_states.reshape(M, H)                      # fold B into the matmul M dim

    # Block-diagonal additive mask (M, M): user mask on the diagonal (same-batch) blocks,
    # -1e9 on cross-batch blocks so the batch-folded attention is exactly per-batch.
    mask3 = attention_mask.reshape(B, S, S).astype(jnp.float32)
    b_ids = jnp.arange(B)
    same_batch = b_ids[:, None, None, None] == b_ids[None, None, :, None]   # (B,1,B,1)
    mask_bd = jnp.where(same_batch, mask3[:, :, None, :], jnp.float32(NEG_BIG))
    mask_bd = mask_bd.reshape(M, M)

    # Fused QKV weights with the RMSNorm gamma folded in: x*rsqrt(var) @ (diag(gamma) @ W).
    gamma = rms_weight.astype(jnp.float32)
    wqkv = jnp.concatenate([wq, wk, wv], axis=1)           # (H, H + 2*KV)
    wqkv = gamma[:, None] * wqkv
    gamma2d = gamma.reshape(1, H)

    kernel = functools.partial(_decoder_layer_kernel,
                               num_heads=nh, num_kv_heads=nkv, head_dim=d)
    vmem = pl.BlockSpec(memory_space=pltpu.MemorySpace.VMEM)   # whole array resident in VMEM

    hidden2, normed2, attn2 = pl.pallas_call(
        kernel,
        out_shape=(jax.ShapeDtypeStruct((M, H), hidden_states.dtype),   # residual output
                   jax.ShapeDtypeStruct((M, H), hidden_states.dtype),   # RMSNorm output
                   jax.ShapeDtypeStruct((M, H), hidden_states.dtype)),  # attention output
        in_specs=[vmem] * 5,
        out_specs=(vmem, vmem, vmem),
    )(x2d, mask_bd, wqkv, wo, gamma2d)

    return (hidden2.reshape(B, S, H),
            normed2.reshape(B, S, H),
            attn2.reshape(B, S, H))


def _reference(hidden_states, attention_mask, wq, wk, wv, wo, rms_weight):
    """Plain-JAX reference mirroring the PyTorch forward, for a correctness check."""
    hi = jax.lax.Precision.HIGHEST
    x = hidden_states.astype(jnp.float32)
    var = jnp.mean(x * x, axis=-1, keepdims=True)
    normed = rms_weight * (x * jax.lax.rsqrt(var + RMS_EPS))
    q = jnp.dot(normed, wq, precision=hi)
    k = jnp.dot(normed, wk, precision=hi)
    v = jnp.dot(normed, wv, precision=hi)
    B, S, _ = q.shape
    q = q.reshape(B, S, NUM_HEADS, HEAD_DIM).transpose(0, 2, 1, 3)
    k = k.reshape(B, S, NUM_KV_HEADS, HEAD_DIM).transpose(0, 2, 1, 3)
    v = v.reshape(B, S, NUM_KV_HEADS, HEAD_DIM).transpose(0, 2, 1, 3)
    k = jnp.repeat(k, N_REP, axis=1)
    v = jnp.repeat(v, N_REP, axis=1)
    scores = jnp.einsum('bhqd,bhkd->bhqk', q, k, precision=hi) / math.sqrt(HEAD_DIM)
    scores = scores + attention_mask                       # (B,1,S,S) broadcasts over heads
    probs = jax.nn.softmax(scores.astype(jnp.float32), axis=-1)
    attn = jnp.einsum('bhqk,bhkd->bhqd', probs, v, precision=hi)
    attn = attn.transpose(0, 2, 1, 3).reshape(B, S, HIDDEN)
    attn_out = jnp.dot(attn, wo, precision=hi)
    return hidden_states + attn_out, normed, attn_out


if __name__ == "__main__":
    key = jax.random.PRNGKey(0)
    k_x, k_q, k_k, k_v, k_o, k_g = jax.random.split(key, 6)

    hidden_states = jax.random.normal(k_x, (BATCH, SEQ, HIDDEN), dtype=jnp.float32)

    # Deterministic "init" (std = initializer_range = 0.02), weights stored as (in, out).
    wq = 0.02 * jax.random.normal(k_q, (HIDDEN, HIDDEN), dtype=jnp.float32)
    wk = 0.02 * jax.random.normal(k_k, (HIDDEN, KV_DIM), dtype=jnp.float32)
    wv = 0.02 * jax.random.normal(k_v, (HIDDEN, KV_DIM), dtype=jnp.float32)
    wo = 0.02 * jax.random.normal(k_o, (HIDDEN, HIDDEN), dtype=jnp.float32)
    # LlamaRMSNorm init is ones; perturb slightly so the gamma-folding path is exercised.
    rms_weight = (1.0 + 0.05 * jax.random.normal(k_g, (HIDDEN,))).astype(jnp.float32)

    # Causal additive mask in the PyTorch (B, 1, S, S) convention.
    causal = jnp.where(jnp.tril(jnp.ones((SEQ, SEQ), dtype=bool)), 0.0, -1e9).astype(jnp.float32)
    attention_mask = jnp.broadcast_to(causal, (BATCH, 1, SEQ, SEQ))

    out, normed, attn_out = suma_decoder_layer(
        hidden_states, attention_mask, wq, wk, wv, wo, rms_weight)
    jax.block_until_ready((out, normed, attn_out))

    ref_out, ref_normed, ref_attn = _reference(
        hidden_states, attention_mask, wq, wk, wv, wo, rms_weight)

    # normed has no matmul -> tight tolerance; attention paths differ from the reference only
    # in fp32 reduction/association order (fused weights, folded gamma), so stay well inside 1e-4.
    assert jnp.allclose(normed, ref_normed, atol=1e-5, rtol=1e-5)
    assert jnp.allclose(attn_out, ref_attn, atol=1e-4, rtol=1e-4)
    assert jnp.allclose(out, ref_out, atol=1e-4, rtol=1e-4)

    print("KERNEL_OK")
</pallas_src>

<mosaic_0001>
module attributes {stable_mosaic.version = 11 : i64} {
  func.func @_decoder_layer_kernel(%arg0: memref<16x32xf32, #tpu.memory_space<vmem>>, %arg1: memref<16x16xf32, #tpu.memory_space<vmem>>, %arg2: memref<32x64xf32, #tpu.memory_space<vmem>>, %arg3: memref<32x32xf32, #tpu.memory_space<vmem>>, %arg4: memref<1x32xf32, #tpu.memory_space<vmem>>, %arg5: memref<16x32xf32, #tpu.memory_space<vmem>>, %arg6: memref<16x32xf32, #tpu.memory_space<vmem>>, %arg7: memref<16x32xf32, #tpu.memory_space<vmem>>) attributes {dimension_semantics = [], scalar_prefetch = 0 : i64, scratch_operands = 0 : i64, tpu.core_type = #tpu.core_type<tc>} {
    %c0 = arith.constant 0 : index
    %c0_0 = arith.constant 0 : index
    %0 = vector.load %arg0[%c0, %c0_0] : memref<16x32xf32, #tpu.memory_space<vmem>>, vector<16x32xf32>
    %c0_1 = arith.constant 0 : index
    %c0_2 = arith.constant 0 : index
    %1 = vector.load %arg1[%c0_1, %c0_2] : memref<16x16xf32, #tpu.memory_space<vmem>>, vector<16x16xf32>
    %2 = arith.mulf %0, %0 : vector<16x32xf32>
    %cst = arith.constant dense<0.000000e+00> : vector<16xf32>
    %3 = vector.multi_reduction <add>, %2, %cst [1] : vector<16x32xf32> to vector<16xf32>
    %4 = vector.shape_cast %3 : vector<16xf32> to vector<16x1xf32>
    %cst_3 = arith.constant 3.200000e+01 : f32
    %5 = vector.broadcast %cst_3 : f32 to vector<16x1xf32>
    %6 = arith.divf %4, %5 : vector<16x1xf32>
    %cst_4 = arith.constant 9.99999997E-7 : f32
    %7 = vector.broadcast %cst_4 : f32 to vector<16x1xf32>
    %8 = arith.addf %6, %7 : vector<16x1xf32>
    %9 = math.rsqrt %8 : vector<16x1xf32>
    %10 = vector.broadcast %9 : vector<16x1xf32> to vector<16x32xf32>
    %11 = arith.mulf %0, %10 : vector<16x32xf32>
    %c0_5 = arith.constant 0 : index
    %c0_6 = arith.constant 0 : index
    %12 = vector.load %arg4[%c0_5, %c0_6] : memref<1x32xf32, #tpu.memory_space<vmem>>, vector<1x32xf32>
    %13 = vector.broadcast %12 : vector<1x32xf32> to vector<16x32xf32>
    %14 = arith.mulf %13, %11 : vector<16x32xf32>
    %c0_7 = arith.constant 0 : index
    %c0_8 = arith.constant 0 : index
    %15 = vector.load %arg6[%c0_7, %c0_8] : memref<16x32xf32, #tpu.memory_space<vmem>>, vector<16x32xf32>
    tpu.vector_store %arg6[%c0_7, %c0_8], %14 {strides = array<i32>} : memref<16x32xf32, #tpu.memory_space<vmem>>, vector<16x32xf32>,
    %c0_9 = arith.constant 0 : index
    %c0_10 = arith.constant 0 : index
    %16 = vector.load %arg2[%c0_9, %c0_10] : memref<32x64xf32, #tpu.memory_space<vmem>>, vector<32x64xf32>
    %cst_11 = arith.constant dense<0.000000e+00> : vector<16x64xf32>
    %17 = tpu.matmul %11, %16, %cst_11 {dimension_numbers = #tpu.dot_dimension_numbers<[1], [0], [0], [1], [0, 0, 1, 1], [], []>, precision = #tpu.contract_precision<fp32>} : vector<16x32xf32>, vector<32x64xf32>, vector<16x64xf32> -> vector<16x64xf32>
    %cst_12 = arith.constant 0.000000e+00 : f32
    %18 = vector.broadcast %cst_12 : f32 to vector<16x32xf32>
    %19 = vector.extract_strided_slice %17 {offsets = [0, 0], sizes = [16, 8], strides = [1, 1]} : vector<16x64xf32> to vector<16x8xf32>
    %20 = vector.extract_strided_slice %17 {offsets = [0, 32], sizes = [16, 8], strides = [1, 1]} : vector<16x64xf32> to vector<16x8xf32>
    %21 = vector.extract_strided_slice %17 {offsets = [0, 48], sizes = [16, 8], strides = [1, 1]} : vector<16x64xf32> to vector<16x8xf32>
    %cst_13 = arith.constant dense<0.000000e+00> : vector<16x16xf32>
    %22 = tpu.matmul %19, %20, %cst_13 {dimension_numbers = #tpu.dot_dimension_numbers<[1], [1], [0], [0], [0, 0, 1, 0], [], []>, precision = #tpu.contract_precision<fp32>} : vector<16x8xf32>, vector<16x8xf32>, vector<16x16xf32> -> vector<16x16xf32>
    %cst_14 = arith.constant 0.353553385 : f32
    %23 = vector.broadcast %cst_14 : f32 to vector<16x16xf32>
    %24 = arith.mulf %22, %23 : vector<16x16xf32>
    %25 = arith.addf %24, %1 : vector<16x16xf32>
    %cst_15 = arith.constant dense<0xFF800000> : vector<16xf32>
    %26 = vector.multi_reduction <maximumf>, %25, %cst_15 [1] : vector<16x16xf32> to vector<16xf32>
    %27 = vector.shape_cast %26 : vector<16xf32> to vector<16x1xf32>
    %28 = vector.broadcast %27 : vector<16x1xf32> to vector<16x16xf32>
    %29 = arith.subf %25, %28 : vector<16x16xf32>
    %30 = math.exp %29 : vector<16x16xf32>
    %cst_16 = arith.constant dense<0.000000e+00> : vector<16xf32>
    %31 = vector.multi_reduction <add>, %30, %cst_16 [1] : vector<16x16xf32> to vector<16xf32>
    %32 = vector.shape_cast %31 : vector<16xf32> to vector<16x1xf32>
    %33 = vector.broadcast %32 : vector<16x1xf32> to vector<16x16xf32>
    %34 = arith.divf %30, %33 : vector<16x16xf32>
    %cst_17 = arith.constant dense<0.000000e+00> : vector<16x8xf32>
    %35 = tpu.matmul %34, %21, %cst_17 {dimension_numbers = #tpu.dot_dimension_numbers<[1], [0], [0], [1], [0, 0, 1, 1], [], []>, precision = #tpu.contract_precision<fp32>} : vector<16x16xf32>, vector<16x8xf32>, vector<16x8xf32> -> vector<16x8xf32>
    %c0_18 = arith.constant 0 : index
    %c0_19 = arith.constant 0 : index
    %36 = vector.load %arg3[%c0_18, %c0_19] : memref<32x32xf32, #tpu.memory_space<vmem>>, vector<8x32xf32>
    %cst_20 = arith.constant dense<0.000000e+00> : vector<16x32xf32>
    %37 = tpu.matmul %35, %36, %cst_20 {dimension_numbers = #tpu.dot_dimension_numbers<[1], [0], [0], [1], [0, 0, 1, 1], [], []>, precision = #tpu.contract_precision<fp32>} : vector<16x8xf32>, vector<8x32xf32>, vector<16x32xf32> -> vector<16x32xf32>
    %38 = arith.addf %18, %37 : vector<16x32xf32>
    %39 = vector.extract_strided_slice %17 {offsets = [0, 8], sizes = [16, 8], strides = [1, 1]} : vector<16x64xf32> to vector<16x8xf32>
    %40 = vector.extract_strided_slice %17 {offsets = [0, 32], sizes = [16, 8], strides = [1, 1]} : vector<16x64xf32> to vector<16x8xf32>
    %41 = vector.extract_strided_slice %17 {offsets = [0, 48], sizes = [16, 8], strides = [1, 1]} : vector<16x64xf32> to vector<16x8xf32>
    %cst_21 = arith.constant dense<0.000000e+00> : vector<16x16xf32>
    %42 = tpu.matmul %39, %40, %cst_21 {dimension_numbers = #tpu.dot_dimension_numbers<[1], [1], [0], [0], [0, 0, 1, 0], [], []>, precision = #tpu.contract_precision<fp32>} : vector<16x8xf32>, vector<16x8xf32>, vector<16x16xf32> -> vector<16x16xf32>
    %cst_22 = arith.constant 0.353553385 : f32
    %43 = vector.broadcast %cst_22 : f32 to vector<16x16xf32>
    %44 = arith.mulf %42, %43 : vector<16x16xf32>
    %45 = arith.addf %44, %1 : vector<16x16xf32>
    %cst_23 = arith.constant dense<0xFF800000> : vector<16xf32>
    %46 = vector.multi_reduction <maximumf>, %45, %cst_23 [1] : vector<16x16xf32> to vector<16xf32>
    %47 = vector.shape_cast %46 : vector<16xf32> to vector<16x1xf32>
    %48 = vector.broadcast %47 : vector<16x1xf32> to vector<16x16xf32>
    %49 = arith.subf %45, %48 : vector<16x16xf32>
    %50 = math.exp %49 : vector<16x16xf32>
    %cst_24 = arith.constant dense<0.000000e+00> : vector<16xf32>
    %51 = vector.multi_reduction <add>, %50, %cst_24 [1] : vector<16x16xf32> to vector<16xf32>
    %52 = vector.shape_cast %51 : vector<16xf32> to vector<16x1xf32>
    %53 = vector.broadcast %52 : vector<16x1xf32> to vector<16x16xf32>
    %54 = arith.divf %50, %53 : vector<16x16xf32>
    %cst_25 = arith.constant dense<0.000000e+00> : vector<16x8xf32>
    %55 = tpu.matmul %54, %41, %cst_25 {dimension_numbers = #tpu.dot_dimension_numbers<[1], [0], [0], [1], [0, 0, 1, 1], [], []>, precision = #tpu.contract_precision<fp32>} : vector<16x16xf32>, vector<16x8xf32>, vector<16x8xf32> -> vector<16x8xf32>
    %c8 = arith.constant 8 : index
    %c0_26 = arith.constant 0 : index
    %56 = vector.load %arg3[%c8, %c0_26] : memref<32x32xf32, #tpu.memory_space<vmem>>, vector<8x32xf32>
    %cst_27 = arith.constant dense<0.000000e+00> : vector<16x32xf32>
    %57 = tpu.matmul %55, %56, %cst_27 {dimension_numbers = #tpu.dot_dimension_numbers<[1], [0], [0], [1], [0, 0, 1, 1], [], []>, precision = #tpu.contract_precision<fp32>} : vector<16x8xf32>, vector<8x32xf32>, vector<16x32xf32> -> vector<16x32xf32>
    %58 = arith.addf %38, %57 : vector<16x32xf32>
    %59 = vector.extract_strided_slice %17 {offsets = [0, 16], sizes = [16, 8], strides = [1, 1]} : vector<16x64xf32> to vector<16x8xf32>
    %60 = vector.extract_strided_slice %17 {offsets = [0, 40], sizes = [16, 8], strides = [1, 1]} : vector<16x64xf32> to vector<16x8xf32>
    %61 = vector.extract_strided_slice %17 {offsets = [0, 56], sizes = [16, 8], strides = [1, 1]} : vector<16x64xf32> to vector<16x8xf32>
    %cst_28 = arith.constant dense<0.000000e+00> : vector<16x16xf32>
    %62 = tpu.matmul %59, %60, %cst_28 {dimension_numbers = #tpu.dot_dimension_numbers<[1], [1], [0], [0], [0, 0, 1, 0], [], []>, precision = #tpu.contract_precision<fp32>} : vector<16x8xf32>, vector<16x8xf32>, vector<16x16xf32> -> vector<16x16xf32>
    %cst_29 = arith.constant 0.353553385 : f32
    %63 = vector.broadcast %cst_29 : f32 to vector<16x16xf32>
    %64 = arith.mulf %62, %63 : vector<16x16xf32>
    %65 = arith.addf %64, %1 : vector<16x16xf32>
    %cst_30 = arith.constant dense<0xFF800000> : vector<16xf32>
    %66 = vector.multi_reduction <maximumf>, %65, %cst_30 [1] : vector<16x16xf32> to vector<16xf32>
    %67 = vector.shape_cast %66 : vector<16xf32> to vector<16x1xf32>
    %68 = vector.broadcast %67 : vector<16x1xf32> to vector<16x16xf32>
    %69 = arith.subf %65, %68 : vector<16x16xf32>
    %70 = math.exp %69 : vector<16x16xf32>
    %cst_31 = arith.constant dense<0.000000e+00> : vector<16xf32>
    %71 = vector.multi_reduction <add>, %70, %cst_31 [1] : vector<16x16xf32> to vector<16xf32>
    %72 = vector.shape_cast %71 : vector<16xf32> to vector<16x1xf32>
    %73 = vector.broadcast %72 : vector<16x1xf32> to vector<16x16xf32>
    %74 = arith.divf %70, %73 : vector<16x16xf32>
    %cst_32 = arith.constant dense<0.000000e+00> : vector<16x8xf32>
    %75 = tpu.matmul %74, %61, %cst_32 {dimension_numbers = #tpu.dot_dimension_numbers<[1], [0], [0], [1], [0, 0, 1, 1], [], []>, precision = #tpu.contract_precision<fp32>} : vector<16x16xf32>, vector<16x8xf32>, vector<16x8xf32> -> vector<16x8xf32>
    %c16 = arith.constant 16 : index
    %c0_33 = arith.constant 0 : index
    %76 = vector.load %arg3[%c16, %c0_33] : memref<32x32xf32, #tpu.memory_space<vmem>>, vector<8x32xf32>
    %cst_34 = arith.constant dense<0.000000e+00> : vector<16x32xf32>
    %77 = tpu.matmul %75, %76, %cst_34 {dimension_numbers = #tpu.dot_dimension_numbers<[1], [0], [0], [1], [0, 0, 1, 1], [], []>, precision = #tpu.contract_precision<fp32>} : vector<16x8xf32>, vector<8x32xf32>, vector<16x32xf32> -> vector<16x32xf32>
    %78 = arith.addf %58, %77 : vector<16x32xf32>
    %79 = vector.extract_strided_slice %17 {offsets = [0, 24], sizes = [16, 8], strides = [1, 1]} : vector<16x64xf32> to vector<16x8xf32>
    %80 = vector.extract_strided_slice %17 {offsets = [0, 40], sizes = [16, 8], strides = [1, 1]} : vector<16x64xf32> to vector<16x8xf32>
    %81 = vector.extract_strided_slice %17 {offsets = [0, 56], sizes = [16, 8], strides = [1, 1]} : vector<16x64xf32> to vector<16x8xf32>
    %cst_35 = arith.constant dense<0.000000e+00> : vector<16x16xf32>
    %82 = tpu.matmul %79, %80, %cst_35 {dimension_numbers = #tpu.dot_dimension_numbers<[1], [1], [0], [0], [0, 0, 1, 0], [], []>, precision = #tpu.contract_precision<fp32>} : vector<16x8xf32>, vector<16x8xf32>, vector<16x16xf32> -> vector<16x16xf32>
    %cst_36 = arith.constant 0.353553385 : f32
    %83 = vector.broadcast %cst_36 : f32 to vector<16x16xf32>
    %84 = arith.mulf %82, %83 : vector<16x16xf32>
    %85 = arith.addf %84, %1 : vector<16x16xf32>
    %cst_37 = arith.constant dense<0xFF800000> : vector<16xf32>
    %86 = vector.multi_reduction <maximumf>, %85, %cst_37 [1] : vector<16x16xf32> to vector<16xf32>
    %87 = vector.shape_cast %86 : vector<16xf32> to vector<16x1xf32>
    %88 = vector.broadcast %87 : vector<16x1xf32> to vector<16x16xf32>
    %89 = arith.subf %85, %88 : vector<16x16xf32>
    %90 = math.exp %89 : vector<16x16xf32>
    %cst_38 = arith.constant dense<0.000000e+00> : vector<16xf32>
    %91 = vector.multi_reduction <add>, %90, %cst_38 [1] : vector<16x16xf32> to vector<16xf32>
    %92 = vector.shape_cast %91 : vector<16xf32> to vector<16x1xf32>
    %93 = vector.broadcast %92 : vector<16x1xf32> to vector<16x16xf32>
    %94 = arith.divf %90, %93 : vector<16x16xf32>
    %cst_39 = arith.constant dense<0.000000e+00> : vector<16x8xf32>
    %95 = tpu.matmul %94, %81, %cst_39 {dimension_numbers = #tpu.dot_dimension_numbers<[1], [0], [0], [1], [0, 0, 1, 1], [], []>, precision = #tpu.contract_precision<fp32>} : vector<16x16xf32>, vector<16x8xf32>, vector<16x8xf32> -> vector<16x8xf32>
    %c24 = arith.constant 24 : index
    %c0_40 = arith.constant 0 : index
    %96 = vector.load %arg3[%c24, %c0_40] : memref<32x32xf32, #tpu.memory_space<vmem>>, vector<8x32xf32>
    %cst_41 = arith.constant dense<0.000000e+00> : vector<16x32xf32>
    %97 = tpu.matmul %95, %96, %cst_41 {dimension_numbers = #tpu.dot_dimension_numbers<[1], [0], [0], [1], [0, 0, 1, 1], [], []>, precision = #tpu.contract_precision<fp32>} : vector<16x8xf32>, vector<8x32xf32>, vector<16x32xf32> -> vector<16x32xf32>
    %98 = arith.addf %78, %97 : vector<16x32xf32>
    %c0_42 = arith.constant 0 : index
    %c0_43 = arith.constant 0 : index
    %99 = vector.load %arg7[%c0_42, %c0_43] : memref<16x32xf32, #tpu.memory_space<vmem>>, vector<16x32xf32>
    tpu.vector_store %arg7[%c0_42, %c0_43], %98 {strides = array<i32>} : memref<16x32xf32, #tpu.memory_space<vmem>>, vector<16x32xf32>,
    %100 = arith.addf %0, %98 : vector<16x32xf32>
    %c0_44 = arith.constant 0 : index
    %c0_45 = arith.constant 0 : index
    %101 = vector.load %arg5[%c0_44, %c0_45] : memref<16x32xf32, #tpu.memory_space<vmem>>, vector<16x32xf32>
    tpu.vector_store %arg5[%c0_44, %c0_45], %100 {strides = array<i32>} : memref<16x32xf32, #tpu.memory_space<vmem>>, vector<16x32xf32>,
    return
  }
}

</mosaic_0001>

<llo_original>
// kernel: suma_decoder_layer.1
$region0: #{suma_decoder_layer.1}
  #allocation0 [shape = 'u32[]', space=smem, size = 0x4, offset = 0x4, fixed_abs, tag = 'smem constant byte address 0x4 - core index']
  #allocation1 [shape = 'u32[72,128]{1,0:T(1,128)}', space=vmem, size = 0x9000, scoped, tag = 'internal scratch']
  %s0 = inlined_call_operand.vmem [shape: f32[16,32], index: 0, kind: input, shape index: {}]
  %s1 = inlined_call_operand.vmem [shape: f32[16,16], index: 1, kind: input, shape index: {}]
  %s2 = inlined_call_operand.vmem [shape: f32[32,64], index: 2, kind: input, shape index: {}]
  %s3 = inlined_call_operand.vmem [shape: f32[32,32], index: 3, kind: input, shape index: {}]
  %s4 = inlined_call_operand.vmem [shape: f32[1,32], index: 4, kind: input, shape index: {}]
  %s5 = inlined_call_operand.hbm [shape: f32[16,32], index: 5, kind: output, shape index: {0}]
  %s6 = inlined_call_operand.hbm [shape: f32[16,32], index: 6, kind: output, shape index: {1}]
  %s7 = inlined_call_operand.hbm [shape: f32[16,32], index: 7, kind: output, shape index: {2}]
  %8 = xla_tuple %s5, %s6, %s7
  %s9 = sld [smem:[#allocation0]]
  $region46: #{suma_decoder_layer.1} parent=0
    _
  %s11 = ssub.s32 1, %s9
  %s12 = scalar_select 0, %s11, %s9
  $region1: #{suma_decoder_layer.1} parent=0
    #allocation2 [shape = 'u8[8192]{0}', space=vmem, size = 0x2000, scoped, tag = 'output window, operand 0, single buffered']
    #allocation3 [shape = 's32[1]{0}', space=sflag, size = 0x4, scoped, tag = 'scoped memory for suma_decoder_layer.1']
    #allocation4 [shape = 'u8[8192]{0}', space=vmem, size = 0x2000, scoped, tag = 'output window, operand 1, single buffered']
    #allocation5 [shape = 's32[1]{0}', space=sflag, size = 0x4, scoped, tag = 'scoped memory for suma_decoder_layer.1']
    #allocation6 [shape = 'u8[8192]{0}', space=vmem, size = 0x2000, scoped, tag = 'output window, operand 2, single buffered']
    %13 = vsyncpa [#allocation3], 0
    %14 = vsyncpa [#allocation5], 0
    // Predicated region
    $region2: #{suma_decoder_layer.1} parent=1 // pred_check
      _
    $region3: #{suma_decoder_layer.1} parent=1 // pred_check_branch
      %16 = sbr.rel (0) target = $region5
    $region4: #{suma_decoder_layer.1} parent=1 // pred_region
      _
    $region5: #{suma_decoder_layer.1} parent=1 // pred_fallthru
      _
    // Predicated region
    $region6: #{suma_decoder_layer.1} parent=1 // pred_check
      _
    $region7: #{suma_decoder_layer.1} parent=1 // pred_check_branch
      %18 = sbr.rel (0) target = $region9
    $region8: #{suma_decoder_layer.1} parent=1 // pred_region
      _
    $region9: #{suma_decoder_layer.1} parent=1 // pred_fallthru
      _
    // Predicated region
    $region10: #{suma_decoder_layer.1} parent=1 // pred_check
      _
    $region11: #{suma_decoder_layer.1} parent=1 // pred_check_branch
      %20 = sbr.rel (0) target = $region13
    $region12: #{suma_decoder_layer.1} parent=1 // pred_region
      _
    $region13: #{suma_decoder_layer.1} parent=1 // pred_fallthru
      _
    // Predicated region
    $region14: #{suma_decoder_layer.1} parent=1 // pred_check
      _
    $region15: #{suma_decoder_layer.1} parent=1 // pred_check_branch
      %22 = sbr.rel (0) target = $region17
    $region16: #{suma_decoder_layer.1} parent=1 // pred_region
      _
    $region17: #{suma_decoder_layer.1} parent=1 // pred_fallthru
      _
    // Predicated region
    $region18: #{suma_decoder_layer.1} parent=1 // pred_check
      _
    $region19: #{suma_decoder_layer.1} parent=1 // pred_check_branch
      %24 = sbr.rel (0) target = $region21
    $region20: #{suma_decoder_layer.1} parent=1 // pred_region
      _
    $region21: #{suma_decoder_layer.1} parent=1 // pred_fallthru
      _
    %v25 = vld [vmem:[%s0] sm:$0xff]
    %v26 = vld [vmem:[%s0 + $0x8] sm:$0xff]
    %v27 = vld [vmem:[%s1] sm:$0xff]
    %v28 = vld [vmem:[%s1 + $0x8] sm:$0xff]
    %v29 = vmul.f32 %v25, %v25
    %v30 = vmul.f32 %v26, %v26
    %vm31 = vcmask 261120
    %v32 = vsel %vm31, %v29, 0.0
    %33 = vadd.xlane.f32.xlu0 %v32
    %v34 = vpop.xlane.xlu0 %33
    %v35 = vsel %vm31, %v30, 0.0
    %36 = vadd.xlane.f32.xlu0 %v35
    %v37 = vpop.xlane.xlu0 %36
    %v38 = vrcp.pop 32.0
    %v39 = vmul.f32 32.0, %v38
    %v40 = vsub.f32 1.0, %v39
    %v41 = vmul.f32 %v38, %v40
    %v42 = vadd.f32 %v38, %v41
    %vm43 = vweird.f32 %v38
    %v44 = vsel %vm43, %v38, %v42
    %v45 = vmul.f32 %v34, %v44
    %v46 = vmul.f32 %v37, %v44
    %v47 = vadd.f32 %v45, 1e-06
    %v48 = vadd.f32 %v46, 1e-06
    %v49 = vrsqrt.pop %v47
    %v50 = vmul.f32 %v49, %v47
    %v51 = vmul.f32 %v50, %v49
    %v52 = vmul.f32 0.5, %v51
    %v53 = vsub.f32 1.5, %v52
    %v54 = vmul.f32 %v49, %v53
    %vm55 = vweird.f32 %v47
    %vm56 = vweird.f32 %v49
    %vm57 = vmor %vm55, %vm56
    %v58 = vsel %vm57, %v49, %v54
    %v59 = vrsqrt.pop %v48
    %v60 = vmul.f32 %v59, %v48
    %v61 = vmul.f32 %v60, %v59
    %v62 = vmul.f32 0.5, %v61
    %v63 = vsub.f32 1.5, %v62
    %v64 = vmul.f32 %v59, %v63
    %vm65 = vweird.f32 %v48
    %vm66 = vweird.f32 %v59
    %vm67 = vmor %vm65, %vm66
    %v68 = vsel %vm67, %v59, %v64
    %v69 = vmul.f32 %v25, %v58
    %v70 = vmul.f32 %v26, %v68
    %v71 = vld [vmem:[%s4] sm:$0x1]
    %v73 = vperm.slane %v71, 0
    %v75 = vmul.f32 %v73, %v69
    %v76 = vmul.f32 %v73, %v70
    %77 = vst.msk [vmem:[#allocation4] sm:$0xff] %vm31, %v75
    %78 = vst.msk [vmem:[#allocation4 + $0x8] sm:$0xff] %vm31, %v76
    %v79 = vld [vmem:[%s2] sm:$0xff]
    %v80 = vld [vmem:[%s2 + $0x8] sm:$0xff]
    %v81 = vld [vmem:[%s2 + $0x10] sm:$0xff]
    %v82 = vld [vmem:[%s2 + $0x18] sm:$0xff]
    %v84 = vsel %vm31, %v69, 0
    %v87 = vsel %vm31, %v70, 0
    %89 = vmatpush.msra.mxu0 0.0
    %90 = vmatpush.msra.mxu0 0.0
    %91 = vmatpush.msra.mxu0 0.0
    %92 = vmatpush.msra.mxu0 0.0
    %93 = vmatpush.msra.mxu0 0.0
    %94 = vmatpush.msra.mxu0 0.0
    %95 = vmatpush.msra.mxu0 0.0
    %96 = vmatpush.msra.mxu0 0.0
    %97 = vmatpush.msra.mxu0 0.0
    %98 = vmatpush.msra.mxu0 0.0
    %99 = vmatpush.msra.mxu0 0.0
    %100 = vmatpush.msra.mxu0 0.0
    %v101 = vand.u32 %v82, 4294901760
    %102 = vmatpush.msra.mxu0 %v101
    %v103 = vand.u32 %v81, 4294901760
    %104 = vmatpush.msra.mxu0 %v103
    %v105 = vand.u32 %v80, 4294901760
    %106 = vmatpush.msra.mxu0 %v105
    %v107 = vand.u32 %v79, 4294901760
    %108 = vmatpush.msra.mxu0 %v107
    %v109 = vand.u32 %v84, 4294901760
    %v110 = vsub.f32 %v84, %v109
    %v111 = vand.u32 %v110, 4294901760
    %v112 = vsub.f32 %v110, %v111
    %v113 = vand.u32 %v112, 4294901760
    %114 = vmatmul.f32.gmra.mxu0 %v113
    %v115 = vpop.f32.mrf.mxu0
    %v116 = vadd.f32 0.0, %v115
    %v117 = vand.u32 %v87, 4294901760
    %v118 = vsub.f32 %v87, %v117
    %v119 = vand.u32 %v118, 4294901760
    %v120 = vsub.f32 %v118, %v119
    %v121 = vand.u32 %v120, 4294901760
    %122 = vmatmul.f32.gmra.mxu0 %v121
    %v123 = vpop.f32.mrf.mxu0
    %v124 = vadd.f32 0.0, %v123
    %125 = vdwg.mxu0
    %126 = vmatpush.msra.mxu0 0.0
    %127 = vmatpush.msra.mxu0 0.0
    %128 = vmatpush.msra.mxu0 0.0
    %129 = vmatpush.msra.mxu0 0.0
    %130 = vmatpush.msra.mxu0 0.0
    %131 = vmatpush.msra.mxu0 0.0
    %132 = vmatpush.msra.mxu0 0.0
    %133 = vmatpush.msra.mxu0 0.0
    %134 = vmatpush.msra.mxu0 0.0
    %135 = vmatpush.msra.mxu0 0.0
    %136 = vmatpush.msra.mxu0 0.0
    %137 = vmatpush.msra.mxu0 0.0
    %v138 = vand.u32 %v82, 4294901760
    %v139 = vsub.f32 %v82, %v138
    %v140 = vand.u32 %v139, 4294901760
    %v141 = vsub.f32 %v139, %v140
    %v142 = vand.u32 %v141, 4294901760
    %143 = vmatpush.msra.mxu0 %v142
    %v144 = vand.u32 %v81, 4294901760
    %v145 = vsub.f32 %v81, %v144
    %v146 = vand.u32 %v145, 4294901760
    %v147 = vsub.f32 %v145, %v146
    %v148 = vand.u32 %v147, 4294901760
    %149 = vmatpush.msra.mxu0 %v148
    %v150 = vand.u32 %v80, 4294901760
    %v151 = vsub.f32 %v80, %v150
    %v152 = vand.u32 %v151, 4294901760
    %v153 = vsub.f32 %v151, %v152
    %v154 = vand.u32 %v153, 4294901760
    %155 = vmatpush.msra.mxu0 %v154
    %v156 = vand.u32 %v79, 4294901760
    %v157 = vsub.f32 %v79, %v156
    %v158 = vand.u32 %v157, 4294901760
    %v159 = vsub.f32 %v157, %v158
    %v160 = vand.u32 %v159, 4294901760
    %161 = vmatpush.msra.mxu0 %v160
    %v162 = vand.u32 %v84, 4294901760
    %163 = vmatmul.f32.gmra.mxu0 %v162
    %v164 = vpop.f32.mrf.mxu0
    %v165 = vadd.f32 %v116, %v164
    %v166 = vand.u32 %v87, 4294901760
    %167 = vmatmul.f32.gmra.mxu0 %v166
    %v168 = vpop.f32.mrf.mxu0
    %v169 = vadd.f32 %v124, %v168
    %170 = vdwg.mxu0
    %171 = vmatpush.msra.mxu0 0.0
    %172 = vmatpush.msra.mxu0 0.0
    %173 = vmatpush.msra.mxu0 0.0
    %174 = vmatpush.msra.mxu0 0.0
    %175 = vmatpush.msra.mxu0 0.0
    %176 = vmatpush.msra.mxu0 0.0
    %177 = vmatpush.msra.mxu0 0.0
    %178 = vmatpush.msra.mxu0 0.0
    %179 = vmatpush.msra.mxu0 0.0
    %180 = vmatpush.msra.mxu0 0.0
    %181 = vmatpush.msra.mxu0 0.0
    %182 = vmatpush.msra.mxu0 0.0
    %v183 = vand.u32 %v82, 4294901760
    %v184 = vsub.f32 %v82, %v183
    %185 = vmatpush.msra.mxu0 %v184
    %v186 = vand.u32 %v81, 4294901760
    %v187 = vsub.f32 %v81, %v186
    %188 = vmatpush.msra.mxu0 %v187
    %v189 = vand.u32 %v80, 4294901760
    %v190 = vsub.f32 %v80, %v189
    %191 = vmatpush.msra.mxu0 %v190
    %v192 = vand.u32 %v79, 4294901760
    %v193 = vsub.f32 %v79, %v192
    %194 = vmatpush.msra.mxu0 %v193
    %v195 = vand.u32 %v84, 4294901760
    %v196 = vsub.f32 %v84, %v195
    %197 = vmatmul.f32.gmra.mxu0 %v196
    %v198 = vpop.f32.mrf.mxu0
    %v199 = vadd.f32 %v165, %v198
    %v200 = vand.u32 %v87, 4294901760
    %v201 = vsub.f32 %v87, %v200
    %202 = vmatmul.f32.gmra.mxu0 %v201
    %v203 = vpop.f32.mrf.mxu0
    %v204 = vadd.f32 %v169, %v203
    %205 = vdwg.mxu0
    %206 = vmatpush.msra.mxu0 0.0
    %207 = vmatpush.msra.mxu0 0.0
    %208 = vmatpush.msra.mxu0 0.0
    %209 = vmatpush.msra.mxu0 0.0
    %210 = vmatpush.msra.mxu0 0.0
    %211 = vmatpush.msra.mxu0 0.0
    %212 = vmatpush.msra.mxu0 0.0
    %213 = vmatpush.msra.mxu0 0.0
    %214 = vmatpush.msra.mxu0 0.0
    %215 = vmatpush.msra.mxu0 0.0
    %216 = vmatpush.msra.mxu0 0.0
    %217 = vmatpush.msra.mxu0 0.0
    %v218 = vand.u32 %v82, 4294901760
    %219 = vmatpush.msra.mxu0 %v218
    %v220 = vand.u32 %v81, 4294901760
    %221 = vmatpush.msra.mxu0 %v220
    %v222 = vand.u32 %v80, 4294901760
    %223 = vmatpush.msra.mxu0 %v222
    %v224 = vand.u32 %v79, 4294901760
    %225 = vmatpush.msra.mxu0 %v224
    %v226 = vand.u32 %v84, 4294901760
    %v227 = vsub.f32 %v84, %v226
    %v228 = vand.u32 %v227, 4294901760
    %229 = vmatmul.f32.gmra.mxu0 %v228
    %v230 = vpop.f32.mrf.mxu0
    %v231 = vadd.f32 %v199, %v230
    %v232 = vand.u32 %v87, 4294901760
    %v233 = vsub.f32 %v87, %v232
    %v234 = vand.u32 %v233, 4294901760
    %235 = vmatmul.f32.gmra.mxu0 %v234
    %v236 = vpop.f32.mrf.mxu0
    %v237 = vadd.f32 %v204, %v236
    %238 = vdwg.mxu0
    %239 = vmatpush.msra.mxu0 0.0
    %240 = vmatpush.msra.mxu0 0.0
    %241 = vmatpush.msra.mxu0 0.0
    %242 = vmatpush.msra.mxu0 0.0
    %243 = vmatpush.msra.mxu0 0.0
    %244 = vmatpush.msra.mxu0 0.0
    %245 = vmatpush.msra.mxu0 0.0
    %246 = vmatpush.msra.mxu0 0.0
    %247 = vmatpush.msra.mxu0 0.0
    %248 = vmatpush.msra.mxu0 0.0
    %249 = vmatpush.msra.mxu0 0.0
    %250 = vmatpush.msra.mxu0 0.0
    %v251 = vand.u32 %v82, 4294901760
    %v252 = vsub.f32 %v82, %v251
    %v253 = vand.u32 %v252, 4294901760
    %254 = vmatpush.msra.mxu0 %v253
    %v255 = vand.u32 %v81, 4294901760
    %v256 = vsub.f32 %v81, %v255
    %v257 = vand.u32 %v256, 4294901760
    %258 = vmatpush.msra.mxu0 %v257
    %v259 = vand.u32 %v80, 4294901760
    %v260 = vsub.f32 %v80, %v259
    %v261 = vand.u32 %v260, 4294901760
    %262 = vmatpush.msra.mxu0 %v261
    %v263 = vand.u32 %v79, 4294901760
    %v264 = vsub.f32 %v79, %v263
    %v265 = vand.u32 %v264, 4294901760
    %266 = vmatpush.msra.mxu0 %v265
    %v267 = vand.u32 %v84, 4294901760
    %268 = vmatmul.f32.gmra.mxu0 %v267
    %v269 = vpop.f32.mrf.mxu0
    %v270 = vadd.f32 %v231, %v269
    %v271 = vand.u32 %v87, 4294901760
    %272 = vmatmul.f32.gmra.mxu0 %v271
    %v273 = vpop.f32.mrf.mxu0
    %v274 = vadd.f32 %v237, %v273
    %275 = vdwg.mxu0
    %276 = vmatpush.msra.mxu0 0.0
    %277 = vmatpush.msra.mxu0 0.0
    %278 = vmatpush.msra.mxu0 0.0
    %279 = vmatpush.msra.mxu0 0.0
    %280 = vmatpush.msra.mxu0 0.0
    %281 = vmatpush.msra.mxu0 0.0
    %282 = vmatpush.msra.mxu0 0.0
    %283 = vmatpush.msra.mxu0 0.0
    %284 = vmatpush.msra.mxu0 0.0
    %285 = vmatpush.msra.mxu0 0.0
    %286 = vmatpush.msra.mxu0 0.0
    %287 = vmatpush.msra.mxu0 0.0
    %v288 = vand.u32 %v82, 4294901760
    %289 = vmatpush.msra.mxu0 %v288
    %v290 = vand.u32 %v81, 4294901760
    %291 = vmatpush.msra.mxu0 %v290
    %v292 = vand.u32 %v80, 4294901760
    %293 = vmatpush.msra.mxu0 %v292
    %v294 = vand.u32 %v79, 4294901760
    %295 = vmatpush.msra.mxu0 %v294
    %v296 = vand.u32 %v84, 4294901760
    %297 = vmatmul.f32.gmra.mxu0 %v296
    %v298 = vpop.f32.mrf.mxu0
    %v299 = vadd.f32 %v270, %v298
    %v300 = vand.u32 %v87, 4294901760
    %301 = vmatmul.f32.gmra.mxu0 %v300
    %v302 = vpop.f32.mrf.mxu0
    %v303 = vadd.f32 %v274, %v302
    %304 = vdwg.mxu0
    %307 = vrot.lane.b32.xlu0 %v299, 96
    %v308 = vpop.permute.xlu0 %307
    %309 = vrot.lane.b32.xlu0 %v303, 96
    %v310 = vpop.permute.xlu0 %309
    %vm311 = vcmask 64512
    %v312 = vsel %vm311, %v299, 0
    %v314 = vsel %vm311, %v303, 0
    %v316 = vsel %vm311, %v308, 0
    %v318 = vsel %vm311, %v310, 0
    %320 = vmatpush.xpose.msra.mxu0 0.0
    %321 = vmatpush.xpose.msra.mxu0 0.0
    %322 = vmatpush.xpose.msra.mxu0 0.0
    %323 = vmatpush.xpose.msra.mxu0 0.0
    %324 = vmatpush.xpose.msra.mxu0 0.0
    %325 = vmatpush.xpose.msra.mxu0 0.0
    %326 = vmatpush.xpose.msra.mxu0 0.0
    %327 = vmatpush.xpose.msra.mxu0 0.0
    %328 = vmatpush.xpose.msra.mxu0 0.0
    %329 = vmatpush.xpose.msra.mxu0 0.0
    %330 = vmatpush.xpose.msra.mxu0 0.0
    %331 = vmatpush.xpose.msra.mxu0 0.0
    %332 = vmatpush.xpose.msra.mxu0 0.0
    %333 = vmatpush.xpose.msra.mxu0 0.0
    %v334 = vand.u32 %v318, 4294901760
    %335 = vmatpush.xpose.msra.mxu0 %v334
    %v336 = vand.u32 %v316, 4294901760
    %337 = vmatpush.xpose.msra.mxu0 %v336
    %v338 = vand.u32 %v312, 4294901760
    %v339 = vsub.f32 %v312, %v338
    %v340 = vand.u32 %v339, 4294901760
    %v341 = vsub.f32 %v339, %v340
    %v342 = vand.u32 %v341, 4294901760
    %343 = vmatmul.f32.gmra.mxu0 %v342
    %v344 = vpop.f32.mrf.mxu0
    %v345 = vadd.f32 0.0, %v344
    %v346 = vand.u32 %v314, 4294901760
    %v347 = vsub.f32 %v314, %v346
    %v348 = vand.u32 %v347, 4294901760
    %v349 = vsub.f32 %v347, %v348
    %v350 = vand.u32 %v349, 4294901760
    %351 = vmatmul.f32.gmra.mxu0 %v350
    %v352 = vpop.f32.mrf.mxu0
    %v353 = vadd.f32 0.0, %v352
    %354 = vdwg.mxu0
    %355 = vmatpush.xpose.msra.mxu0 0.0
    %356 = vmatpush.xpose.msra.mxu0 0.0
    %357 = vmatpush.xpose.msra.mxu0 0.0
    %358 = vmatpush.xpose.msra.mxu0 0.0
    %359 = vmatpush.xpose.msra.mxu0 0.0
    %360 = vmatpush.xpose.msra.mxu0 0.0
    %361 = vmatpush.xpose.msra.mxu0 0.0
    %362 = vmatpush.xpose.msra.mxu0 0.0
    %363 = vmatpush.xpose.msra.mxu0 0.0
    %364 = vmatpush.xpose.msra.mxu0 0.0
    %365 = vmatpush.xpose.msra.mxu0 0.0
    %366 = vmatpush.xpose.msra.mxu0 0.0
    %367 = vmatpush.xpose.msra.mxu0 0.0
    %368 = vmatpush.xpose.msra.mxu0 0.0
    %v369 = vand.u32 %v318, 4294901760
    %v370 = vsub.f32 %v318, %v369
    %v371 = vand.u32 %v370, 4294901760
    %v372 = vsub.f32 %v370, %v371
    %v373 = vand.u32 %v372, 4294901760
    %374 = vmatpush.xpose.msra.mxu0 %v373
    %v375 = vand.u32 %v316, 4294901760
    %v376 = vsub.f32 %v316, %v375
    %v377 = vand.u32 %v376, 4294901760
    %v378 = vsub.f32 %v376, %v377
    %v379 = vand.u32 %v378, 4294901760
    %380 = vmatpush.xpose.msra.mxu0 %v379
    %v381 = vand.u32 %v312, 4294901760
    %382 = vmatmul.f32.gmra.mxu0 %v381
    %v383 = vpop.f32.mrf.mxu0
    %v384 = vadd.f32 %v345, %v383
    %v385 = vand.u32 %v314, 4294901760
    %386 = vmatmul.f32.gmra.mxu0 %v385
    %v387 = vpop.f32.mrf.mxu0
    %v388 = vadd.f32 %v353, %v387
    %389 = vdwg.mxu0
    %390 = vmatpush.xpose.msra.mxu0 0.0
    %391 = vmatpush.xpose.msra.mxu0 0.0
    %392 = vmatpush.xpose.msra.mxu0 0.0
    %393 = vmatpush.xpose.msra.mxu0 0.0
    %394 = vmatpush.xpose.msra.mxu0 0.0
    %395 = vmatpush.xpose.msra.mxu0 0.0
    %396 = vmatpush.xpose.msra.mxu0 0.0
    %397 = vmatpush.xpose.msra.mxu0 0.0
    %398 = vmatpush.xpose.msra.mxu0 0.0
    %399 = vmatpush.xpose.msra.mxu0 0.0
    %400 = vmatpush.xpose.msra.mxu0 0.0
    %401 = vmatpush.xpose.msra.mxu0 0.0
    %402 = vmatpush.xpose.msra.mxu0 0.0
    %403 = vmatpush.xpose.msra.mxu0 0.0
    %v404 = vand.u32 %v318, 4294901760
    %v405 = vsub.f32 %v318, %v404
    %406 = vmatpush.xpose.msra.mxu0 %v405
    %v407 = vand.u32 %v316, 4294901760
    %v408 = vsub.f32 %v316, %v407
    %409 = vmatpush.xpose.msra.mxu0 %v408
    %v410 = vand.u32 %v312, 4294901760
    %v411 = vsub.f32 %v312, %v410
    %412 = vmatmul.f32.gmra.mxu0 %v411
    %v413 = vpop.f32.mrf.mxu0
    %v414 = vadd.f32 %v384, %v413
    %v415 = vand.u32 %v314, 4294901760
    %v416 = vsub.f32 %v314, %v415
    %417 = vmatmul.f32.gmra.mxu0 %v416
    %v418 = vpop.f32.mrf.mxu0
    %v419 = vadd.f32 %v388, %v418
    %420 = vdwg.mxu0
    %421 = vmatpush.xpose.msra.mxu0 0.0
    %422 = vmatpush.xpose.msra.mxu0 0.0
    %423 = vmatpush.xpose.msra.mxu0 0.0
    %424 = vmatpush.xpose.msra.mxu0 0.0
    %425 = vmatpush.xpose.msra.mxu0 0.0
    %426 = vmatpush.xpose.msra.mxu0 0.0
    %427 = vmatpush.xpose.msra.mxu0 0.0
    %428 = vmatpush.xpose.msra.mxu0 0.0
    %429 = vmatpush.xpose.msra.mxu0 0.0
    %430 = vmatpush.xpose.msra.mxu0 0.0
    %431 = vmatpush.xpose.msra.mxu0 0.0
    %432 = vmatpush.xpose.msra.mxu0 0.0
    %433 = vmatpush.xpose.msra.mxu0 0.0
    %434 = vmatpush.xpose.msra.mxu0 0.0
    %v435 = vand.u32 %v318, 4294901760
    %436 = vmatpush.xpose.msra.mxu0 %v435
    %v437 = vand.u32 %v316, 4294901760
    %438 = vmatpush.xpose.msra.mxu0 %v437
    %v439 = vand.u32 %v312, 4294901760
    %v440 = vsub.f32 %v312, %v439
    %v441 = vand.u32 %v440, 4294901760
    %442 = vmatmul.f32.gmra.mxu0 %v441
    %v443 = vpop.f32.mrf.mxu0
    %v444 = vadd.f32 %v414, %v443
    %v445 = vand.u32 %v314, 4294901760
    %v446 = vsub.f32 %v314, %v445
    %v447 = vand.u32 %v446, 4294901760
    %448 = vmatmul.f32.gmra.mxu0 %v447
    %v449 = vpop.f32.mrf.mxu0
    %v450 = vadd.f32 %v419, %v449
    %451 = vdwg.mxu0
    %452 = vmatpush.xpose.msra.mxu0 0.0
    %453 = vmatpush.xpose.msra.mxu0 0.0
    %454 = vmatpush.xpose.msra.mxu0 0.0
    %455 = vmatpush.xpose.msra.mxu0 0.0
    %456 = vmatpush.xpose.msra.mxu0 0.0
    %457 = vmatpush.xpose.msra.mxu0 0.0
    %458 = vmatpush.xpose.msra.mxu0 0.0
    %459 = vmatpush.xpose.msra.mxu0 0.0
    %460 = vmatpush.xpose.msra.mxu0 0.0
    %461 = vmatpush.xpose.msra.mxu0 0.0
    %462 = vmatpush.xpose.msra.mxu0 0.0
    %463 = vmatpush.xpose.msra.mxu0 0.0
    %464 = vmatpush.xpose.msra.mxu0 0.0
    %465 = vmatpush.xpose.msra.mxu0 0.0
    %v466 = vand.u32 %v318, 4294901760
    %v467 = vsub.f32 %v318, %v466
    %v468 = vand.u32 %v467, 4294901760
    %469 = vmatpush.xpose.msra.mxu0 %v468
    %v470 = vand.u32 %v316, 4294901760
    %v471 = vsub.f32 %v316, %v470
    %v472 = vand.u32 %v471, 4294901760
    %473 = vmatpush.xpose.msra.mxu0 %v472
    %v474 = vand.u32 %v312, 4294901760
    %475 = vmatmul.f32.gmra.mxu0 %v474
    %v476 = vpop.f32.mrf.mxu0
    %v477 = vadd.f32 %v444, %v476
    %v478 = vand.u32 %v314, 4294901760
    %479 = vmatmul.f32.gmra.mxu0 %v478
    %v480 = vpop.f32.mrf.mxu0
    %v481 = vadd.f32 %v450, %v480
    %482 = vdwg.mxu0
    %483 = vmatpush.xpose.msra.mxu0 0.0
    %484 = vmatpush.xpose.msra.mxu0 0.0
    %485 = vmatpush.xpose.msra.mxu0 0.0
    %486 = vmatpush.xpose.msra.mxu0 0.0
    %487 = vmatpush.xpose.msra.mxu0 0.0
    %488 = vmatpush.xpose.msra.mxu0 0.0
    %489 = vmatpush.xpose.msra.mxu0 0.0
    %490 = vmatpush.xpose.msra.mxu0 0.0
    %491 = vmatpush.xpose.msra.mxu0 0.0
    %492 = vmatpush.xpose.msra.mxu0 0.0
    %493 = vmatpush.xpose.msra.mxu0 0.0
    %494 = vmatpush.xpose.msra.mxu0 0.0
    %495 = vmatpush.xpose.msra.mxu0 0.0
    %496 = vmatpush.xpose.msra.mxu0 0.0
    %v497 = vand.u32 %v318, 4294901760
    %498 = vmatpush.xpose.msra.mxu0 %v497
    %v499 = vand.u32 %v316, 4294901760
    %500 = vmatpush.xpose.msra.mxu0 %v499
    %v501 = vand.u32 %v312, 4294901760
    %502 = vmatmul.f32.gmra.mxu0 %v501
    %v503 = vpop.f32.mrf.mxu0
    %v504 = vadd.f32 %v477, %v503
    %v505 = vand.u32 %v314, 4294901760
    %506 = vmatmul.f32.gmra.mxu0 %v505
    %v507 = vpop.f32.mrf.mxu0
    %v508 = vadd.f32 %v481, %v507
    %509 = vdwg.mxu0
    %v510 = vmul.f32 %v504, 0.35355338
    %v511 = vmul.f32 %v508, 0.35355338
    %v512 = vadd.f32 %v510, %v27
    %v513 = vadd.f32 %v511, %v28
    %vm514 = vcmask 130048
    %v515 = vsel %vm514, %v512, -inf
    %516 = vmax.xlane.f32.xlu0 %v515
    %v517 = vpop.xlane.xlu0 %516
    %v518 = vsel %vm514, %v513, -inf
    %519 = vmax.xlane.f32.xlu0 %v518
    %v520 = vpop.xlane.xlu0 %519
    %v521 = vsub.f32 %v512, %v517
    %v522 = vsub.f32 %v513, %v520
    %v523 = vmul.f32 %v521, 1.442695
    %v524 = vpow.pop %v523
    %v525 = vmul.f32 %v522, 1.442695
    %v526 = vpow.pop %v525
    %v527 = vsel %vm514, %v524, 0.0
    %528 = vadd.xlane.f32.xlu0 %v527
    %v529 = vpop.xlane.xlu0 %528
    %v530 = vsel %vm514, %v526, 0.0
    %531 = vadd.xlane.f32.xlu0 %v530
    %v532 = vpop.xlane.xlu0 %531
    %v533 = vrcp.pop %v529
    %v534 = vmul.f32 %v529, %v533
    %v535 = vsub.f32 1.0, %v534
    %v536 = vmul.f32 %v533, %v535
    %v537 = vadd.f32 %v533, %v536
    %vm538 = vweird.f32 %v529
    %vm539 = vweird.f32 %v533
    %vm540 = vmor %vm538, %vm539
    %v541 = vsel %vm540, %v533, %v537
    %v542 = vand.u32 2147483647, %v529
    %vm543 = vcmp.eq.f32.partialorder %v542, 8.507059e+37
    %v544 = vand.u32 %v529, 2147483648
    %v545 = vor.u32 1.1754944e-38, %v544
    %v546 = vsel %vm543, %v545, %v541
    %v547 = vmul.f32 %v524, %v546
    %v548 = vrcp.pop %v532
    %v549 = vmul.f32 %v532, %v548
    %v550 = vsub.f32 1.0, %v549
    %v551 = vmul.f32 %v548, %v550
    %v552 = vadd.f32 %v548, %v551
    %vm553 = vweird.f32 %v532
    %vm554 = vweird.f32 %v548
    %vm555 = vmor %vm553, %vm554
    %v556 = vsel %vm555, %v548, %v552
    %v557 = vand.u32 2147483647, %v532
    %vm558 = vcmp.eq.f32.partialorder %v557, 8.507059e+37
    %v559 = vand.u32 %v532, 2147483648
    %v560 = vor.u32 1.1754944e-38, %v559
    %v561 = vsel %vm558, %v560, %v556
    %v562 = vmul.f32 %v526, %v561
    %563 = vrot.lane.b32.xlu0 %v299, 80
    %v564 = vpop.permute.xlu0 %563
    %565 = vrot.lane.b32.xlu0 %v303, 80
    %v566 = vpop.permute.xlu0 %565
    %v570 = vsel %vm514, %v547, 0
    %v573 = vsel %vm514, %v562, 0
    %575 = vmatpush.msra.mxu0 0.0
    %576 = vmatpush.msra.mxu0 0.0
    %577 = vmatpush.msra.mxu0 0.0
    %578 = vmatpush.msra.mxu0 0.0
    %579 = vmatpush.msra.mxu0 0.0
    %580 = vmatpush.msra.mxu0 0.0
    %581 = vmatpush.msra.mxu0 0.0
    %582 = vmatpush.msra.mxu0 0.0
    %583 = vmatpush.msra.mxu0 0.0
    %584 = vmatpush.msra.mxu0 0.0
    %585 = vmatpush.msra.mxu0 0.0
    %586 = vmatpush.msra.mxu0 0.0
    %587 = vmatpush.msra.mxu0 0.0
    %588 = vmatpush.msra.mxu0 0.0
    %v589 = vand.u32 %v566, 4294901760
    %590 = vmatpush.msra.mxu0 %v589
    %v591 = vand.u32 %v564, 4294901760
    %592 = vmatpush.msra.mxu0 %v591
    %v593 = vand.u32 %v570, 4294901760
    %v594 = vsub.f32 %v570, %v593
    %v595 = vand.u32 %v594, 4294901760
    %v596 = vsub.f32 %v594, %v595
    %v597 = vand.u32 %v596, 4294901760
    %598 = vmatmul.f32.gmra.mxu0 %v597
    %v599 = vpop.f32.mrf.mxu0
    %v600 = vadd.f32 0.0, %v599
    %v601 = vand.u32 %v573, 4294901760
    %v602 = vsub.f32 %v573, %v601
    %v603 = vand.u32 %v602, 4294901760
    %v604 = vsub.f32 %v602, %v603
    %v605 = vand.u32 %v604, 4294901760
    %606 = vmatmul.f32.gmra.mxu0 %v605
    %v607 = vpop.f32.mrf.mxu0
    %v608 = vadd.f32 0.0, %v607
    %609 = vdwg.mxu0
    %610 = vmatpush.msra.mxu0 0.0
    %611 = vmatpush.msra.mxu0 0.0
    %612 = vmatpush.msra.mxu0 0.0
    %613 = vmatpush.msra.mxu0 0.0
    %614 = vmatpush.msra.mxu0 0.0
    %615 = vmatpush.msra.mxu0 0.0
    %616 = vmatpush.msra.mxu0 0.0
    %617 = vmatpush.msra.mxu0 0.0
    %618 = vmatpush.msra.mxu0 0.0
    %619 = vmatpush.msra.mxu0 0.0
    %620 = vmatpush.msra.mxu0 0.0
    %621 = vmatpush.msra.mxu0 0.0
    %622 = vmatpush.msra.mxu0 0.0
    %623 = vmatpush.msra.mxu0 0.0
    %v624 = vand.u32 %v566, 4294901760
    %v625 = vsub.f32 %v566, %v624
    %v626 = vand.u32 %v625, 4294901760
    %v627 = vsub.f32 %v625, %v626
    %v628 = vand.u32 %v627, 4294901760
    %629 = vmatpush.msra.mxu0 %v628
    %v630 = vand.u32 %v564, 4294901760
    %v631 = vsub.f32 %v564, %v630
    %v632 = vand.u32 %v631, 4294901760
    %v633 = vsub.f32 %v631, %v632
    %v634 = vand.u32 %v633, 4294901760
    %635 = vmatpush.msra.mxu0 %v634
    %v636 = vand.u32 %v570, 4294901760
    %637 = vmatmul.f32.gmra.mxu0 %v636
    %v638 = vpop.f32.mrf.mxu0
    %v639 = vadd.f32 %v600, %v638
    %v640 = vand.u32 %v573, 4294901760
    %641 = vmatmul.f32.gmra.mxu0 %v640
    %v642 = vpop.f32.mrf.mxu0
    %v643 = vadd.f32 %v608, %v642
    %644 = vdwg.mxu0
    %645 = vmatpush.msra.mxu0 0.0
    %646 = vmatpush.msra.mxu0 0.0
    %647 = vmatpush.msra.mxu0 0.0
    %648 = vmatpush.msra.mxu0 0.0
    %649 = vmatpush.msra.mxu0 0.0
    %650 = vmatpush.msra.mxu0 0.0
    %651 = vmatpush.msra.mxu0 0.0
    %652 = vmatpush.msra.mxu0 0.0
    %653 = vmatpush.msra.mxu0 0.0
    %654 = vmatpush.msra.mxu0 0.0
    %655 = vmatpush.msra.mxu0 0.0
    %656 = vmatpush.msra.mxu0 0.0
    %657 = vmatpush.msra.mxu0 0.0
    %658 = vmatpush.msra.mxu0 0.0
    %v659 = vand.u32 %v566, 4294901760
    %v660 = vsub.f32 %v566, %v659
    %661 = vmatpush.msra.mxu0 %v660
    %v662 = vand.u32 %v564, 4294901760
    %v663 = vsub.f32 %v564, %v662
    %664 = vmatpush.msra.mxu0 %v663
    %v665 = vand.u32 %v570, 4294901760
    %v666 = vsub.f32 %v570, %v665
    %667 = vmatmul.f32.gmra.mxu0 %v666
    %v668 = vpop.f32.mrf.mxu0
    %v669 = vadd.f32 %v639, %v668
    %v670 = vand.u32 %v573, 4294901760
    %v671 = vsub.f32 %v573, %v670
    %672 = vmatmul.f32.gmra.mxu0 %v671
    %v673 = vpop.f32.mrf.mxu0
    %v674 = vadd.f32 %v643, %v673
    %675 = vdwg.mxu0
    %676 = vmatpush.msra.mxu0 0.0
    %677 = vmatpush.msra.mxu0 0.0
    %678 = vmatpush.msra.mxu0 0.0
    %679 = vmatpush.msra.mxu0 0.0
    %680 = vmatpush.msra.mxu0 0.0
    %681 = vmatpush.msra.mxu0 0.0
    %682 = vmatpush.msra.mxu0 0.0
    %683 = vmatpush.msra.mxu0 0.0
    %684 = vmatpush.msra.mxu0 0.0
    %685 = vmatpush.msra.mxu0 0.0
    %686 = vmatpush.msra.mxu0 0.0
    %687 = vmatpush.msra.mxu0 0.0
    %688 = vmatpush.msra.mxu0 0.0
    %689 = vmatpush.msra.mxu0 0.0
    %v690 = vand.u32 %v566, 4294901760
    %691 = vmatpush.msra.mxu0 %v690
    %v692 = vand.u32 %v564, 4294901760
    %693 = vmatpush.msra.mxu0 %v692
    %v694 = vand.u32 %v570, 4294901760
    %v695 = vsub.f32 %v570, %v694
    %v696 = vand.u32 %v695, 4294901760
    %697 = vmatmul.f32.gmra.mxu0 %v696
    %v698 = vpop.f32.mrf.mxu0
    %v699 = vadd.f32 %v669, %v698
    %v700 = vand.u32 %v573, 4294901760
    %v701 = vsub.f32 %v573, %v700
    %v702 = vand.u32 %v701, 4294901760
    %703 = vmatmul.f32.gmra.mxu0 %v702
    %v704 = vpop.f32.mrf.mxu0
    %v705 = vadd.f32 %v674, %v704
    %706 = vdwg.mxu0
    %707 = vmatpush.msra.mxu0 0.0
    %708 = vmatpush.msra.mxu0 0.0
    %709 = vmatpush.msra.mxu0 0.0
    %710 = vmatpush.msra.mxu0 0.0
    %711 = vmatpush.msra.mxu0 0.0
    %712 = vmatpush.msra.mxu0 0.0
    %713 = vmatpush.msra.mxu0 0.0
    %714 = vmatpush.msra.mxu0 0.0
    %715 = vmatpush.msra.mxu0 0.0
    %716 = vmatpush.msra.mxu0 0.0
    %717 = vmatpush.msra.mxu0 0.0
    %718 = vmatpush.msra.mxu0 0.0
    %719 = vmatpush.msra.mxu0 0.0
    %720 = vmatpush.msra.mxu0 0.0
    %v721 = vand.u32 %v566, 4294901760
    %v722 = vsub.f32 %v566, %v721
    %v723 = vand.u32 %v722, 4294901760
    %724 = vmatpush.msra.mxu0 %v723
    %v725 = vand.u32 %v564, 4294901760
    %v726 = vsub.f32 %v564, %v725
    %v727 = vand.u32 %v726, 4294901760
    %728 = vmatpush.msra.mxu0 %v727
    %v729 = vand.u32 %v570, 4294901760
    %730 = vmatmul.f32.gmra.mxu0 %v729
    %v731 = vpop.f32.mrf.mxu0
    %v732 = vadd.f32 %v699, %v731
    %v733 = vand.u32 %v573, 4294901760
    %734 = vmatmul.f32.gmra.mxu0 %v733
    %v735 = vpop.f32.mrf.mxu0
    %v736 = vadd.f32 %v705, %v735
    %737 = vdwg.mxu0
    %738 = vmatpush.msra.mxu0 0.0
    %739 = vmatpush.msra.mxu0 0.0
    %740 = vmatpush.msra.mxu0 0.0
    %741 = vmatpush.msra.mxu0 0.0
    %742 = vmatpush.msra.mxu0 0.0
    %743 = vmatpush.msra.mxu0 0.0
    %744 = vmatpush.msra.mxu0 0.0
    %745 = vmatpush.msra.mxu0 0.0
    %746 = vmatpush.msra.mxu0 0.0
    %747 = vmatpush.msra.mxu0 0.0
    %748 = vmatpush.msra.mxu0 0.0
    %749 = vmatpush.msra.mxu0 0.0
    %750 = vmatpush.msra.mxu0 0.0
    %751 = vmatpush.msra.mxu0 0.0
    %v752 = vand.u32 %v566, 4294901760
    %753 = vmatpush.msra.mxu0 %v752
    %v754 = vand.u32 %v564, 4294901760
    %755 = vmatpush.msra.mxu0 %v754
    %v756 = vand.u32 %v570, 4294901760
    %757 = vmatmul.f32.gmra.mxu0 %v756
    %v758 = vpop.f32.mrf.mxu0
    %v759 = vadd.f32 %v732, %v758
    %v760 = vand.u32 %v573, 4294901760
    %761 = vmatmul.f32.gmra.mxu0 %v760
    %v762 = vpop.f32.mrf.mxu0
    %v763 = vadd.f32 %v736, %v762
    %764 = vdwg.mxu0
    %v765 = vld [vmem:[%s3] sm:$0xff]
    %766 = vrot.lane.b32.xlu0 %v299, 120
    %v767 = vpop.permute.xlu0 %766
    %768 = vrot.lane.b32.xlu0 %v303, 120
    %v769 = vpop.permute.xlu0 %768
    %v770 = vsel %vm311, %v767, 0
    %v772 = vsel %vm311, %v769, 0
    %774 = vmatpush.xpose.msra.mxu0 0.0
    %775 = vmatpush.xpose.msra.mxu0 0.0
    %776 = vmatpush.xpose.msra.mxu0 0.0
    %777 = vmatpush.xpose.msra.mxu0 0.0
    %778 = vmatpush.xpose.msra.mxu0 0.0
    %779 = vmatpush.xpose.msra.mxu0 0.0
    %780 = vmatpush.xpose.msra.mxu0 0.0
    %781 = vmatpush.xpose.msra.mxu0 0.0
    %782 = vmatpush.xpose.msra.mxu0 0.0
    %783 = vmatpush.xpose.msra.mxu0 0.0
    %784 = vmatpush.xpose.msra.mxu0 0.0
    %785 = vmatpush.xpose.msra.mxu0 0.0
    %786 = vmatpush.xpose.msra.mxu0 0.0
    %787 = vmatpush.xpose.msra.mxu0 0.0
    %v788 = vand.u32 %v318, 4294901760
    %789 = vmatpush.xpose.msra.mxu0 %v788
    %v790 = vand.u32 %v316, 4294901760
    %791 = vmatpush.xpose.msra.mxu0 %v790
    %v792 = vand.u32 %v770, 4294901760
    %v793 = vsub.f32 %v770, %v792
    %v794 = vand.u32 %v793, 4294901760
    %v795 = vsub.f32 %v793, %v794
    %v796 = vand.u32 %v795, 4294901760
    %797 = vmatmul.f32.gmra.mxu0 %v796
    %v798 = vpop.f32.mrf.mxu0
    %v799 = vadd.f32 0.0, %v798
    %v800 = vand.u32 %v772, 4294901760
    %v801 = vsub.f32 %v772, %v800
    %v802 = vand.u32 %v801, 4294901760
    %v803 = vsub.f32 %v801, %v802
    %v804 = vand.u32 %v803, 4294901760
    %805 = vmatmul.f32.gmra.mxu0 %v804
    %v806 = vpop.f32.mrf.mxu0
    %v807 = vadd.f32 0.0, %v806
    %808 = vdwg.mxu0
    %809 = vmatpush.xpose.msra.mxu0 0.0
    %810 = vmatpush.xpose.msra.mxu0 0.0
    %811 = vmatpush.xpose.msra.mxu0 0.0
    %812 = vmatpush.xpose.msra.mxu0 0.0
    %813 = vmatpush.xpose.msra.mxu0 0.0
    %814 = vmatpush.xpose.msra.mxu0 0.0
    %815 = vmatpush.xpose.msra.mxu0 0.0
    %816 = vmatpush.xpose.msra.mxu0 0.0
    %817 = vmatpush.xpose.msra.mxu0 0.0
    %818 = vmatpush.xpose.msra.mxu0 0.0
    %819 = vmatpush.xpose.msra.mxu0 0.0
    %820 = vmatpush.xpose.msra.mxu0 0.0
    %821 = vmatpush.xpose.msra.mxu0 0.0
    %822 = vmatpush.xpose.msra.mxu0 0.0
    %v823 = vand.u32 %v318, 4294901760
    %v824 = vsub.f32 %v318, %v823
    %v825 = vand.u32 %v824, 4294901760
    %v826 = vsub.f32 %v824, %v825
    %v827 = vand.u32 %v826, 4294901760
    %828 = vmatpush.xpose.msra.mxu0 %v827
    %v829 = vand.u32 %v316, 4294901760
    %v830 = vsub.f32 %v316, %v829
    %v831 = vand.u32 %v830, 4294901760
    %v832 = vsub.f32 %v830, %v831
    %v833 = vand.u32 %v832, 4294901760
    %834 = vmatpush.xpose.msra.mxu0 %v833
    %v835 = vand.u32 %v770, 4294901760
    %836 = vmatmul.f32.gmra.mxu0 %v835
    %v837 = vpop.f32.mrf.mxu0
    %v838 = vadd.f32 %v799, %v837
    %v839 = vand.u32 %v772, 4294901760
    %840 = vmatmul.f32.gmra.mxu0 %v839
    %v841 = vpop.f32.mrf.mxu0
    %v842 = vadd.f32 %v807, %v841
    %843 = vdwg.mxu0
    %844 = vmatpush.xpose.msra.mxu0 0.0
    %845 = vmatpush.xpose.msra.mxu0 0.0
    %846 = vmatpush.xpose.msra.mxu0 0.0
    %847 = vmatpush.xpose.msra.mxu0 0.0
    %848 = vmatpush.xpose.msra.mxu0 0.0
    %849 = vmatpush.xpose.msra.mxu0 0.0
    %850 = vmatpush.xpose.msra.mxu0 0.0
    %851 = vmatpush.xpose.msra.mxu0 0.0
    %852 = vmatpush.xpose.msra.mxu0 0.0
    %853 = vmatpush.xpose.msra.mxu0 0.0
    %854 = vmatpush.xpose.msra.mxu0 0.0
    %855 = vmatpush.xpose.msra.mxu0 0.0
    %856 = vmatpush.xpose.msra.mxu0 0.0
    %857 = vmatpush.xpose.msra.mxu0 0.0
    %v858 = vand.u32 %v318, 4294901760
    %v859 = vsub.f32 %v318, %v858
    %860 = vmatpush.xpose.msra.mxu0 %v859
    %v861 = vand.u32 %v316, 4294901760
    %v862 = vsub.f32 %v316, %v861
    %863 = vmatpush.xpose.msra.mxu0 %v862
    %v864 = vand.u32 %v770, 4294901760
    %v865 = vsub.f32 %v770, %v864
    %866 = vmatmul.f32.gmra.mxu0 %v865
    %v867 = vpop.f32.mrf.mxu0
    %v868 = vadd.f32 %v838, %v867
    %v869 = vand.u32 %v772, 4294901760
    %v870 = vsub.f32 %v772, %v869
    %871 = vmatmul.f32.gmra.mxu0 %v870
    %v872 = vpop.f32.mrf.mxu0
    %v873 = vadd.f32 %v842, %v872
    %874 = vdwg.mxu0
    %875 = vmatpush.xpose.msra.mxu0 0.0
    %876 = vmatpush.xpose.msra.mxu0 0.0
    %877 = vmatpush.xpose.msra.mxu0 0.0
    %878 = vmatpush.xpose.msra.mxu0 0.0
    %879 = vmatpush.xpose.msra.mxu0 0.0
    %880 = vmatpush.xpose.msra.mxu0 0.0
    %881 = vmatpush.xpose.msra.mxu0 0.0
    %882 = vmatpush.xpose.msra.mxu0 0.0
    %883 = vmatpush.xpose.msra.mxu0 0.0
    %884 = vmatpush.xpose.msra.mxu0 0.0
    %885 = vmatpush.xpose.msra.mxu0 0.0
    %886 = vmatpush.xpose.msra.mxu0 0.0
    %887 = vmatpush.xpose.msra.mxu0 0.0
    %888 = vmatpush.xpose.msra.mxu0 0.0
    %v889 = vand.u32 %v318, 4294901760
    %890 = vmatpush.xpose.msra.mxu0 %v889
    %v891 = vand.u32 %v316, 4294901760
    %892 = vmatpush.xpose.msra.mxu0 %v891
    %v893 = vand.u32 %v770, 4294901760
    %v894 = vsub.f32 %v770, %v893
    %v895 = vand.u32 %v894, 4294901760
    %896 = vmatmul.f32.gmra.mxu0 %v895
    %v897 = vpop.f32.mrf.mxu0
    %v898 = vadd.f32 %v868, %v897
    %v899 = vand.u32 %v772, 4294901760
    %v900 = vsub.f32 %v772, %v899
    %v901 = vand.u32 %v900, 4294901760
    %902 = vmatmul.f32.gmra.mxu0 %v901
    %v903 = vpop.f32.mrf.mxu0
    %v904 = vadd.f32 %v873, %v903
    %905 = vdwg.mxu0
    %906 = vmatpush.xpose.msra.mxu0 0.0
    %907 = vmatpush.xpose.msra.mxu0 0.0
    %908 = vmatpush.xpose.msra.mxu0 0.0
    %909 = vmatpush.xpose.msra.mxu0 0.0
    %910 = vmatpush.xpose.msra.mxu0 0.0
    %911 = vmatpush.xpose.msra.mxu0 0.0
    %912 = vmatpush.xpose.msra.mxu0 0.0
    %913 = vmatpush.xpose.msra.mxu0 0.0
    %914 = vmatpush.xpose.msra.mxu0 0.0
    %915 = vmatpush.xpose.msra.mxu0 0.0
    %916 = vmatpush.xpose.msra.mxu0 0.0
    %917 = vmatpush.xpose.msra.mxu0 0.0
    %918 = vmatpush.xpose.msra.mxu0 0.0
    %919 = vmatpush.xpose.msra.mxu0 0.0
    %v920 = vand.u32 %v318, 4294901760
    %v921 = vsub.f32 %v318, %v920
    %v922 = vand.u32 %v921, 4294901760
    %923 = vmatpush.xpose.msra.mxu0 %v922
    %v924 = vand.u32 %v316, 4294901760
    %v925 = vsub.f32 %v316, %v924
    %v926 = vand.u32 %v925, 4294901760
    %927 = vmatpush.xpose.msra.mxu0 %v926
    %v928 = vand.u32 %v770, 4294901760
    %929 = vmatmul.f32.gmra.mxu0 %v928
    %v930 = vpop.f32.mrf.mxu0
    %v931 = vadd.f32 %v898, %v930
    %v932 = vand.u32 %v772, 4294901760
    %933 = vmatmul.f32.gmra.mxu0 %v932
    %v934 = vpop.f32.mrf.mxu0
    %v935 = vadd.f32 %v904, %v934
    %936 = vdwg.mxu0
    %937 = vmatpush.xpose.msra.mxu0 0.0
    %938 = vmatpush.xpose.msra.mxu0 0.0
    %939 = vmatpush.xpose.msra.mxu0 0.0
    %940 = vmatpush.xpose.msra.mxu0 0.0
    %941 = vmatpush.xpose.msra.mxu0 0.0
    %942 = vmatpush.xpose.msra.mxu0 0.0
    %943 = vmatpush.xpose.msra.mxu0 0.0
    %944 = vmatpush.xpose.msra.mxu0 0.0
    %945 = vmatpush.xpose.msra.mxu0 0.0
    %946 = vmatpush.xpose.msra.mxu0 0.0
    %947 = vmatpush.xpose.msra.mxu0 0.0
    %948 = vmatpush.xpose.msra.mxu0 0.0
    %949 = vmatpush.xpose.msra.mxu0 0.0
    %950 = vmatpush.xpose.msra.mxu0 0.0
    %v951 = vand.u32 %v318, 4294901760
    %952 = vmatpush.xpose.msra.mxu0 %v951
    %v953 = vand.u32 %v316, 4294901760
    %954 = vmatpush.xpose.msra.mxu0 %v953
    %v955 = vand.u32 %v770, 4294901760
    %956 = vmatmul.f32.gmra.mxu0 %v955
    %v957 = vpop.f32.mrf.mxu0
    %v958 = vadd.f32 %v931, %v957
    %v959 = vand.u32 %v772, 4294901760
    %960 = vmatmul.f32.gmra.mxu0 %v959
    %v961 = vpop.f32.mrf.mxu0
    %v962 = vadd.f32 %v935, %v961
    %963 = vdwg.mxu0
    %v964 = vmul.f32 %v958, 0.35355338
    %v965 = vmul.f32 %v962, 0.35355338
    %v966 = vadd.f32 %v964, %v27
    %v967 = vadd.f32 %v965, %v28
    %v968 = vsel %vm514, %v966, -inf
    %969 = vmax.xlane.f32.xlu0 %v968
    %v970 = vpop.xlane.xlu0 %969
    %v971 = vsel %vm514, %v967, -inf
    %972 = vmax.xlane.f32.xlu0 %v971
    %v973 = vpop.xlane.xlu0 %972
    %v974 = vsub.f32 %v966, %v970
    %v975 = vsub.f32 %v967, %v973
    %v976 = vmul.f32 %v974, 1.442695
    %v977 = vpow.pop %v976
    %v978 = vmul.f32 %v975, 1.442695
    %v979 = vpow.pop %v978
    %v980 = vsel %vm514, %v977, 0.0
    %981 = vadd.xlane.f32.xlu0 %v980
    %v982 = vpop.xlane.xlu0 %981
    %v983 = vsel %vm514, %v979, 0.0
    %984 = vadd.xlane.f32.xlu0 %v983
    %v985 = vpop.xlane.xlu0 %984
    %v986 = vrcp.pop %v982
    %v987 = vmul.f32 %v982, %v986
    %v988 = vsub.f32 1.0, %v987
    %v989 = vmul.f32 %v986, %v988
    %v990 = vadd.f32 %v986, %v989
    %vm991 = vweird.f32 %v982
    %vm992 = vweird.f32 %v986
    %vm993 = vmor %vm991, %vm992
    %v994 = vsel %vm993, %v986, %v990
    %v995 = vand.u32 2147483647, %v982
    %vm996 = vcmp.eq.f32.partialorder %v995, 8.507059e+37
    %v997 = vand.u32 %v982, 2147483648
    %v998 = vor.u32 1.1754944e-38, %v997
    %v999 = vsel %vm996, %v998, %v994
    %v1000 = vmul.f32 %v977, %v999
    %v1001 = vrcp.pop %v985
    %v1002 = vmul.f32 %v985, %v1001
    %v1003 = vsub.f32 1.0, %v1002
    %v1004 = vmul.f32 %v1001, %v1003
    %v1005 = vadd.f32 %v1001, %v1004
    %vm1006 = vweird.f32 %v985
    %vm1007 = vweird.f32 %v1001
    %vm1008 = vmor %vm1006, %vm1007
    %v1009 = vsel %vm1008, %v1001, %v1005
    %v1010 = vand.u32 2147483647, %v985
    %vm1011 = vcmp.eq.f32.partialorder %v1010, 8.507059e+37
    %v1012 = vand.u32 %v985, 2147483648
    %v1013 = vor.u32 1.1754944e-38, %v1012
    %v1014 = vsel %vm1011, %v1013, %v1009
    %v1015 = vmul.f32 %v979, %v1014
    %v1017 = vsel %vm514, %v1000, 0
    %v1020 = vsel %vm514, %v1015, 0
    %1022 = vmatpush.msra.mxu0 0.0
    %1023 = vmatpush.msra.mxu0 0.0
    %1024 = vmatpush.msra.mxu0 0.0
    %1025 = vmatpush.msra.mxu0 0.0
    %1026 = vmatpush.msra.mxu0 0.0
    %1027 = vmatpush.msra.mxu0 0.0
    %1028 = vmatpush.msra.mxu0 0.0
    %1029 = vmatpush.msra.mxu0 0.0
    %1030 = vmatpush.msra.mxu0 0.0
    %1031 = vmatpush.msra.mxu0 0.0
    %1032 = vmatpush.msra.mxu0 0.0
    %1033 = vmatpush.msra.mxu0 0.0
    %1034 = vmatpush.msra.mxu0 0.0
    %1035 = vmatpush.msra.mxu0 0.0
    %v1036 = vand.u32 %v566, 4294901760
    %1037 = vmatpush.msra.mxu0 %v1036
    %v1038 = vand.u32 %v564, 4294901760
    %1039 = vmatpush.msra.mxu0 %v1038
    %v1040 = vand.u32 %v1017, 4294901760
    %v1041 = vsub.f32 %v1017, %v1040
    %v1042 = vand.u32 %v1041, 4294901760
    %v1043 = vsub.f32 %v1041, %v1042
    %v1044 = vand.u32 %v1043, 4294901760
    %1045 = vmatmul.f32.gmra.mxu0 %v1044
    %v1046 = vpop.f32.mrf.mxu0
    %v1047 = vadd.f32 0.0, %v1046
    %v1048 = vand.u32 %v1020, 4294901760
    %v1049 = vsub.f32 %v1020, %v1048
    %v1050 = vand.u32 %v1049, 4294901760
    %v1051 = vsub.f32 %v1049, %v1050
    %v1052 = vand.u32 %v1051, 4294901760
    %1053 = vmatmul.f32.gmra.mxu0 %v1052
    %v1054 = vpop.f32.mrf.mxu0
    %v1055 = vadd.f32 0.0, %v1054
    %1056 = vdwg.mxu0
    %1057 = vmatpush.msra.mxu0 0.0
    %1058 = vmatpush.msra.mxu0 0.0
    %1059 = vmatpush.msra.mxu0 0.0
    %1060 = vmatpush.msra.mxu0 0.0
    %1061 = vmatpush.msra.mxu0 0.0
    %1062 = vmatpush.msra.mxu0 0.0
    %1063 = vmatpush.msra.mxu0 0.0
    %1064 = vmatpush.msra.mxu0 0.0
    %1065 = vmatpush.msra.mxu0 0.0
    %1066 = vmatpush.msra.mxu0 0.0
    %1067 = vmatpush.msra.mxu0 0.0
    %1068 = vmatpush.msra.mxu0 0.0
    %1069 = vmatpush.msra.mxu0 0.0
    %1070 = vmatpush.msra.mxu0 0.0
    %v1071 = vand.u32 %v566, 4294901760
    %v1072 = vsub.f32 %v566, %v1071
    %v1073 = vand.u32 %v1072, 4294901760
    %v1074 = vsub.f32 %v1072, %v1073
    %v1075 = vand.u32 %v1074, 4294901760
    %1076 = vmatpush.msra.mxu0 %v1075
    %v1077 = vand.u32 %v564, 4294901760
    %v1078 = vsub.f32 %v564, %v1077
    %v1079 = vand.u32 %v1078, 4294901760
    %v1080 = vsub.f32 %v1078, %v1079
    %v1081 = vand.u32 %v1080, 4294901760
    %1082 = vmatpush.msra.mxu0 %v1081
    %v1083 = vand.u32 %v1017, 4294901760
    %1084 = vmatmul.f32.gmra.mxu0 %v1083
    %v1085 = vpop.f32.mrf.mxu0
    %v1086 = vadd.f32 %v1047, %v1085
    %v1087 = vand.u32 %v1020, 4294901760
    %1088 = vmatmul.f32.gmra.mxu0 %v1087
    %v1089 = vpop.f32.mrf.mxu0
    %v1090 = vadd.f32 %v1055, %v1089
    %1091 = vdwg.mxu0
    %1092 = vmatpush.msra.mxu0 0.0
    %1093 = vmatpush.msra.mxu0 0.0
    %1094 = vmatpush.msra.mxu0 0.0
    %1095 = vmatpush.msra.mxu0 0.0
    %1096 = vmatpush.msra.mxu0 0.0
    %1097 = vmatpush.msra.mxu0 0.0
    %1098 = vmatpush.msra.mxu0 0.0
    %1099 = vmatpush.msra.mxu0 0.0
    %1100 = vmatpush.msra.mxu0 0.0
    %1101 = vmatpush.msra.mxu0 0.0
    %1102 = vmatpush.msra.mxu0 0.0
    %1103 = vmatpush.msra.mxu0 0.0
    %1104 = vmatpush.msra.mxu0 0.0
    %1105 = vmatpush.msra.mxu0 0.0
    %v1106 = vand.u32 %v566, 4294901760
    %v1107 = vsub.f32 %v566, %v1106
    %1108 = vmatpush.msra.mxu0 %v1107
    %v1109 = vand.u32 %v564, 4294901760
    %v1110 = vsub.f32 %v564, %v1109
    %1111 = vmatpush.msra.mxu0 %v1110
    %v1112 = vand.u32 %v1017, 4294901760
    %v1113 = vsub.f32 %v1017, %v1112
    %1114 = vmatmul.f32.gmra.mxu0 %v1113
    %v1115 = vpop.f32.mrf.mxu0
    %v1116 = vadd.f32 %v1086, %v1115
    %v1117 = vand.u32 %v1020, 4294901760
    %v1118 = vsub.f32 %v1020, %v1117
    %1119 = vmatmul.f32.gmra.mxu0 %v1118
    %v1120 = vpop.f32.mrf.mxu0
    %v1121 = vadd.f32 %v1090, %v1120
    %1122 = vdwg.mxu0
    %1123 = vmatpush.msra.mxu0 0.0
    %1124 = vmatpush.msra.mxu0 0.0
    %1125 = vmatpush.msra.mxu0 0.0
    %1126 = vmatpush.msra.mxu0 0.0
    %1127 = vmatpush.msra.mxu0 0.0
    %1128 = vmatpush.msra.mxu0 0.0
    %1129 = vmatpush.msra.mxu0 0.0
    %1130 = vmatpush.msra.mxu0 0.0
    %1131 = vmatpush.msra.mxu0 0.0
    %1132 = vmatpush.msra.mxu0 0.0
    %1133 = vmatpush.msra.mxu0 0.0
    %1134 = vmatpush.msra.mxu0 0.0
    %1135 = vmatpush.msra.mxu0 0.0
    %1136 = vmatpush.msra.mxu0 0.0
    %v1137 = vand.u32 %v566, 4294901760
    %1138 = vmatpush.msra.mxu0 %v1137
    %v1139 = vand.u32 %v564, 4294901760
    %1140 = vmatpush.msra.mxu0 %v1139
    %v1141 = vand.u32 %v1017, 4294901760
    %v1142 = vsub.f32 %v1017, %v1141
    %v1143 = vand.u32 %v1142, 4294901760
    %1144 = vmatmul.f32.gmra.mxu0 %v1143
    %v1145 = vpop.f32.mrf.mxu0
    %v1146 = vadd.f32 %v1116, %v1145
    %v1147 = vand.u32 %v1020, 4294901760
    %v1148 = vsub.f32 %v1020, %v1147
    %v1149 = vand.u32 %v1148, 4294901760
    %1150 = vmatmul.f32.gmra.mxu0 %v1149
    %v1151 = vpop.f32.mrf.mxu0
    %v1152 = vadd.f32 %v1121, %v1151
    %1153 = vdwg.mxu0
    %1154 = vmatpush.msra.mxu0 0.0
    %1155 = vmatpush.msra.mxu0 0.0
    %1156 = vmatpush.msra.mxu0 0.0
    %1157 = vmatpush.msra.mxu0 0.0
    %1158 = vmatpush.msra.mxu0 0.0
    %1159 = vmatpush.msra.mxu0 0.0
    %1160 = vmatpush.msra.mxu0 0.0
    %1161 = vmatpush.msra.mxu0 0.0
    %1162 = vmatpush.msra.mxu0 0.0
    %1163 = vmatpush.msra.mxu0 0.0
    %1164 = vmatpush.msra.mxu0 0.0
    %1165 = vmatpush.msra.mxu0 0.0
    %1166 = vmatpush.msra.mxu0 0.0
    %1167 = vmatpush.msra.mxu0 0.0
    %v1168 = vand.u32 %v566, 4294901760
    %v1169 = vsub.f32 %v566, %v1168
    %v1170 = vand.u32 %v1169, 4294901760
    %1171 = vmatpush.msra.mxu0 %v1170
    %v1172 = vand.u32 %v564, 4294901760
    %v1173 = vsub.f32 %v564, %v1172
    %v1174 = vand.u32 %v1173, 4294901760
    %1175 = vmatpush.msra.mxu0 %v1174
    %v1176 = vand.u32 %v1017, 4294901760
    %1177 = vmatmul.f32.gmra.mxu0 %v1176
    %v1178 = vpop.f32.mrf.mxu0
    %v1179 = vadd.f32 %v1146, %v1178
    %v1180 = vand.u32 %v1020, 4294901760
    %1181 = vmatmul.f32.gmra.mxu0 %v1180
    %v1182 = vpop.f32.mrf.mxu0
    %v1183 = vadd.f32 %v1152, %v1182
    %1184 = vdwg.mxu0
    %1185 = vmatpush.msra.mxu0 0.0
    %1186 = vmatpush.msra.mxu0 0.0
    %1187 = vmatpush.msra.mxu0 0.0
    %1188 = vmatpush.msra.mxu0 0.0
    %1189 = vmatpush.msra.mxu0 0.0
    %1190 = vmatpush.msra.mxu0 0.0
    %1191 = vmatpush.msra.mxu0 0.0
    %1192 = vmatpush.msra.mxu0 0.0
    %1193 = vmatpush.msra.mxu0 0.0
    %1194 = vmatpush.msra.mxu0 0.0
    %1195 = vmatpush.msra.mxu0 0.0
    %1196 = vmatpush.msra.mxu0 0.0
    %1197 = vmatpush.msra.mxu0 0.0
    %1198 = vmatpush.msra.mxu0 0.0
    %v1199 = vand.u32 %v566, 4294901760
    %1200 = vmatpush.msra.mxu0 %v1199
    %v1201 = vand.u32 %v564, 4294901760
    %1202 = vmatpush.msra.mxu0 %v1201
    %v1203 = vand.u32 %v1017, 4294901760
    %1204 = vmatmul.f32.gmra.mxu0 %v1203
    %v1205 = vpop.f32.mrf.mxu0
    %v1206 = vadd.f32 %v1179, %v1205
    %v1207 = vand.u32 %v1020, 4294901760
    %1208 = vmatmul.f32.gmra.mxu0 %v1207
    %v1209 = vpop.f32.mrf.mxu0
    %v1210 = vadd.f32 %v1183, %v1209
    %1211 = vdwg.mxu0
    %v1212 = vld [vmem:[%s3 + $0x8] sm:$0xff]
    %v1214 = vsel %vm311, %v1206, 0
    %v1217 = vsel %vm311, %v1210, 0
    %1219 = vmatpush.msra.mxu0 0.0
    %1220 = vmatpush.msra.mxu0 0.0
    %1221 = vmatpush.msra.mxu0 0.0
    %1222 = vmatpush.msra.mxu0 0.0
    %1223 = vmatpush.msra.mxu0 0.0
    %1224 = vmatpush.msra.mxu0 0.0
    %1225 = vmatpush.msra.mxu0 0.0
    %1226 = vmatpush.msra.mxu0 0.0
    %1227 = vmatpush.msra.mxu0 0.0
    %1228 = vmatpush.msra.mxu0 0.0
    %1229 = vmatpush.msra.mxu0 0.0
    %1230 = vmatpush.msra.mxu0 0.0
    %1231 = vmatpush.msra.mxu0 0.0
    %1232 = vmatpush.msra.mxu0 0.0
    %1233 = vmatpush.msra.mxu0 0.0
    %v1234 = vand.u32 %v1212, 4294901760
    %1235 = vmatpush.msra.mxu0 %v1234
    %v1236 = vand.u32 %v1214, 4294901760
    %v1237 = vsub.f32 %v1214, %v1236
    %v1238 = vand.u32 %v1237, 4294901760
    %v1239 = vsub.f32 %v1237, %v1238
    %v1240 = vand.u32 %v1239, 4294901760
    %1241 = vmatmul.f32.gmra.mxu0 %v1240
    %v1242 = vpop.f32.mrf.mxu0
    %v1243 = vadd.f32 0.0, %v1242
    %v1244 = vand.u32 %v1217, 4294901760
    %v1245 = vsub.f32 %v1217, %v1244
    %v1246 = vand.u32 %v1245, 4294901760
    %v1247 = vsub.f32 %v1245, %v1246
    %v1248 = vand.u32 %v1247, 4294901760
    %1249 = vmatmul.f32.gmra.mxu0 %v1248
    %v1250 = vpop.f32.mrf.mxu0
    %v1251 = vadd.f32 0.0, %v1250
    %1252 = vdwg.mxu0
    %1253 = vmatpush.msra.mxu0 0.0
    %1254 = vmatpush.msra.mxu0 0.0
    %1255 = vmatpush.msra.mxu0 0.0
    %1256 = vmatpush.msra.mxu0 0.0
    %1257 = vmatpush.msra.mxu0 0.0
    %1258 = vmatpush.msra.mxu0 0.0
    %1259 = vmatpush.msra.mxu0 0.0
    %1260 = vmatpush.msra.mxu0 0.0
    %1261 = vmatpush.msra.mxu0 0.0
    %1262 = vmatpush.msra.mxu0 0.0
    %1263 = vmatpush.msra.mxu0 0.0
    %1264 = vmatpush.msra.mxu0 0.0
    %1265 = vmatpush.msra.mxu0 0.0
    %1266 = vmatpush.msra.mxu0 0.0
    %1267 = vmatpush.msra.mxu0 0.0
    %v1268 = vand.u32 %v1212, 4294901760
    %v1269 = vsub.f32 %v1212, %v1268
    %v1270 = vand.u32 %v1269, 4294901760
    %v1271 = vsub.f32 %v1269, %v1270
    %v1272 = vand.u32 %v1271, 4294901760
    %1273 = vmatpush.msra.mxu0 %v1272
    %v1274 = vand.u32 %v1214, 4294901760
    %1275 = vmatmul.f32.gmra.mxu0 %v1274
    %v1276 = vpop.f32.mrf.mxu0
    %v1277 = vadd.f32 %v1243, %v1276
    %v1278 = vand.u32 %v1217, 4294901760
    %1279 = vmatmul.f32.gmra.mxu0 %v1278
    %v1280 = vpop.f32.mrf.mxu0
    %v1281 = vadd.f32 %v1251, %v1280
    %1282 = vdwg.mxu0
    %1283 = vmatpush.msra.mxu0 0.0
    %1284 = vmatpush.msra.mxu0 0.0
    %1285 = vmatpush.msra.mxu0 0.0
    %1286 = vmatpush.msra.mxu0 0.0
    %1287 = vmatpush.msra.mxu0 0.0
    %1288 = vmatpush.msra.mxu0 0.0
    %1289 = vmatpush.msra.mxu0 0.0
    %1290 = vmatpush.msra.mxu0 0.0
    %1291 = vmatpush.msra.mxu0 0.0
    %1292 = vmatpush.msra.mxu0 0.0
    %1293 = vmatpush.msra.mxu0 0.0
    %1294 = vmatpush.msra.mxu0 0.0
    %1295 = vmatpush.msra.mxu0 0.0
    %1296 = vmatpush.msra.mxu0 0.0
    %1297 = vmatpush.msra.mxu0 0.0
    %v1298 = vand.u32 %v1212, 4294901760
    %v1299 = vsub.f32 %v1212, %v1298
    %1300 = vmatpush.msra.mxu0 %v1299
    %v1301 = vand.u32 %v1214, 4294901760
    %v1302 = vsub.f32 %v1214, %v1301
    %1303 = vmatmul.f32.gmra.mxu0 %v1302
    %v1304 = vpop.f32.mrf.mxu0
    %v1305 = vadd.f32 %v1277, %v1304
    %v1306 = vand.u32 %v1217, 4294901760
    %v1307 = vsub.f32 %v1217, %v1306
    %1308 = vmatmul.f32.gmra.mxu0 %v1307
    %v1309 = vpop.f32.mrf.mxu0
    %v1310 = vadd.f32 %v1281, %v1309
    %1311 = vdwg.mxu0
    %1312 = vmatpush.msra.mxu0 0.0
    %1313 = vmatpush.msra.mxu0 0.0
    %1314 = vmatpush.msra.mxu0 0.0
    %1315 = vmatpush.msra.mxu0 0.0
    %1316 = vmatpush.msra.mxu0 0.0
    %1317 = vmatpush.msra.mxu0 0.0
    %1318 = vmatpush.msra.mxu0 0.0
    %1319 = vmatpush.msra.mxu0 0.0
    %1320 = vmatpush.msra.mxu0 0.0
    %1321 = vmatpush.msra.mxu0 0.0
    %1322 = vmatpush.msra.mxu0 0.0
    %1323 = vmatpush.msra.mxu0 0.0
    %1324 = vmatpush.msra.mxu0 0.0
    %1325 = vmatpush.msra.mxu0 0.0
    %1326 = vmatpush.msra.mxu0 0.0
    %v1327 = vand.u32 %v1212, 4294901760
    %1328 = vmatpush.msra.mxu0 %v1327
    %v1329 = vand.u32 %v1214, 4294901760
    %v1330 = vsub.f32 %v1214, %v1329
    %v1331 = vand.u32 %v1330, 4294901760
    %1332 = vmatmul.f32.gmra.mxu0 %v1331
    %v1333 = vpop.f32.mrf.mxu0
    %v1334 = vadd.f32 %v1305, %v1333
    %v1335 = vand.u32 %v1217, 4294901760
    %v1336 = vsub.f32 %v1217, %v1335
    %v1337 = vand.u32 %v1336, 4294901760
    %1338 = vmatmul.f32.gmra.mxu0 %v1337
    %v1339 = vpop.f32.mrf.mxu0
    %v1340 = vadd.f32 %v1310, %v1339
    %1341 = vdwg.mxu0
    %1342 = vmatpush.msra.mxu0 0.0
    %1343 = vmatpush.msra.mxu0 0.0
    %1344 = vmatpush.msra.mxu0 0.0
    %1345 = vmatpush.msra.mxu0 0.0
    %1346 = vmatpush.msra.mxu0 0.0
    %1347 = vmatpush.msra.mxu0 0.0
    %1348 = vmatpush.msra.mxu0 0.0
    %1349 = vmatpush.msra.mxu0 0.0
    %1350 = vmatpush.msra.mxu0 0.0
    %1351 = vmatpush.msra.mxu0 0.0
    %1352 = vmatpush.msra.mxu0 0.0
    %1353 = vmatpush.msra.mxu0 0.0
    %1354 = vmatpush.msra.mxu0 0.0
    %1355 = vmatpush.msra.mxu0 0.0
    %1356 = vmatpush.msra.mxu0 0.0
    %v1357 = vand.u32 %v1212, 4294901760
    %v1358 = vsub.f32 %v1212, %v1357
    %v1359 = vand.u32 %v1358, 4294901760
    %1360 = vmatpush.msra.mxu0 %v1359
    %v1361 = vand.u32 %v1214, 4294901760
    %1362 = vmatmul.f32.gmra.mxu0 %v1361
    %v1363 = vpop.f32.mrf.mxu0
    %v1364 = vadd.f32 %v1334, %v1363
    %v1365 = vand.u32 %v1217, 4294901760
    %1366 = vmatmul.f32.gmra.mxu0 %v1365
    %v1367 = vpop.f32.mrf.mxu0
    %v1368 = vadd.f32 %v1340, %v1367
    %1369 = vdwg.mxu0
    %1370 = vmatpush.msra.mxu0 0.0
    %1371 = vmatpush.msra.mxu0 0.0
    %1372 = vmatpush.msra.mxu0 0.0
    %1373 = vmatpush.msra.mxu0 0.0
    %1374 = vmatpush.msra.mxu0 0.0
    %1375 = vmatpush.msra.mxu0 0.0
    %1376 = vmatpush.msra.mxu0 0.0
    %1377 = vmatpush.msra.mxu0 0.0
    %1378 = vmatpush.msra.mxu0 0.0
    %1379 = vmatpush.msra.mxu0 0.0
    %1380 = vmatpush.msra.mxu0 0.0
    %1381 = vmatpush.msra.mxu0 0.0
    %1382 = vmatpush.msra.mxu0 0.0
    %1383 = vmatpush.msra.mxu0 0.0
    %1384 = vmatpush.msra.mxu0 0.0
    %v1385 = vand.u32 %v1212, 4294901760
    %1386 = vmatpush.msra.mxu0 %v1385
    %v1387 = vand.u32 %v1214, 4294901760
    %1388 = vmatmul.f32.gmra.mxu0 %v1387
    %v1389 = vpop.f32.mrf.mxu0
    %v1390 = vadd.f32 %v1364, %v1389
    %v1391 = vand.u32 %v1217, 4294901760
    %1392 = vmatmul.f32.gmra.mxu0 %v1391
    %v1393 = vpop.f32.mrf.mxu0
    %v1394 = vadd.f32 %v1368, %v1393
    %1395 = vdwg.mxu0
    %v1397 = vsel %vm311, %v759, 0
    %v1400 = vsel %vm311, %v763, 0
    %1402 = vmatpush.msra.mxu0 0.0
    %1403 = vmatpush.msra.mxu0 0.0
    %1404 = vmatpush.msra.mxu0 0.0
    %1405 = vmatpush.msra.mxu0 0.0
    %1406 = vmatpush.msra.mxu0 0.0
    %1407 = vmatpush.msra.mxu0 0.0
    %1408 = vmatpush.msra.mxu0 0.0
    %1409 = vmatpush.msra.mxu0 0.0
    %1410 = vmatpush.msra.mxu0 0.0
    %1411 = vmatpush.msra.mxu0 0.0
    %1412 = vmatpush.msra.mxu0 0.0
    %1413 = vmatpush.msra.mxu0 0.0
    %1414 = vmatpush.msra.mxu0 0.0
    %1415 = vmatpush.msra.mxu0 0.0
    %1416 = vmatpush.msra.mxu0 0.0
    %v1417 = vand.u32 %v765, 4294901760
    %1418 = vmatpush.msra.mxu0 %v1417
    %v1419 = vand.u32 %v1397, 4294901760
    %v1420 = vsub.f32 %v1397, %v1419
    %v1421 = vand.u32 %v1420, 4294901760
    %v1422 = vsub.f32 %v1420, %v1421
    %v1423 = vand.u32 %v1422, 4294901760
    %1424 = vmatmul.f32.gmra.mxu0 %v1423
    %v1425 = vpop.f32.mrf.mxu0
    %v1426 = vadd.f32 %v1390, %v1425
    %v1427 = vand.u32 %v1400, 4294901760
    %v1428 = vsub.f32 %v1400, %v1427
    %v1429 = vand.u32 %v1428, 4294901760
    %v1430 = vsub.f32 %v1428, %v1429
    %v1431 = vand.u32 %v1430, 4294901760
    %1432 = vmatmul.f32.gmra.mxu0 %v1431
    %v1433 = vpop.f32.mrf.mxu0
    %v1434 = vadd.f32 %v1394, %v1433
    %1435 = vdwg.mxu0
    %1436 = vmatpush.msra.mxu0 0.0
    %1437 = vmatpush.msra.mxu0 0.0
    %1438 = vmatpush.msra.mxu0 0.0
    %1439 = vmatpush.msra.mxu0 0.0
    %1440 = vmatpush.msra.mxu0 0.0
    %1441 = vmatpush.msra.mxu0 0.0
    %1442 = vmatpush.msra.mxu0 0.0
    %1443 = vmatpush.msra.mxu0 0.0
    %1444 = vmatpush.msra.mxu0 0.0
    %1445 = vmatpush.msra.mxu0 0.0
    %1446 = vmatpush.msra.mxu0 0.0
    %1447 = vmatpush.msra.mxu0 0.0
    %1448 = vmatpush.msra.mxu0 0.0
    %1449 = vmatpush.msra.mxu0 0.0
    %1450 = vmatpush.msra.mxu0 0.0
    %v1451 = vand.u32 %v765, 4294901760
    %v1452 = vsub.f32 %v765, %v1451
    %v1453 = vand.u32 %v1452, 4294901760
    %v1454 = vsub.f32 %v1452, %v1453
    %v1455 = vand.u32 %v1454, 4294901760
    %1456 = vmatpush.msra.mxu0 %v1455
    %v1457 = vand.u32 %v1397, 4294901760
    %1458 = vmatmul.f32.gmra.mxu0 %v1457
    %v1459 = vpop.f32.mrf.mxu0
    %v1460 = vadd.f32 %v1426, %v1459
    %v1461 = vand.u32 %v1400, 4294901760
    %1462 = vmatmul.f32.gmra.mxu0 %v1461
    %v1463 = vpop.f32.mrf.mxu0
    %v1464 = vadd.f32 %v1434, %v1463
    %1465 = vdwg.mxu0
    %1466 = vmatpush.msra.mxu0 0.0
    %1467 = vmatpush.msra.mxu0 0.0
    %1468 = vmatpush.msra.mxu0 0.0
    %1469 = vmatpush.msra.mxu0 0.0
    %1470 = vmatpush.msra.mxu0 0.0
    %1471 = vmatpush.msra.mxu0 0.0
    %1472 = vmatpush.msra.mxu0 0.0
    %1473 = vmatpush.msra.mxu0 0.0
    %1474 = vmatpush.msra.mxu0 0.0
    %1475 = vmatpush.msra.mxu0 0.0
    %1476 = vmatpush.msra.mxu0 0.0
    %1477 = vmatpush.msra.mxu0 0.0
    %1478 = vmatpush.msra.mxu0 0.0
    %1479 = vmatpush.msra.mxu0 0.0
    %1480 = vmatpush.msra.mxu0 0.0
    %v1481 = vand.u32 %v765, 4294901760
    %v1482 = vsub.f32 %v765, %v1481
    %1483 = vmatpush.msra.mxu0 %v1482
    %v1484 = vand.u32 %v1397, 4294901760
    %v1485 = vsub.f32 %v1397, %v1484
    %1486 = vmatmul.f32.gmra.mxu0 %v1485
    %v1487 = vpop.f32.mrf.mxu0
    %v1488 = vadd.f32 %v1460, %v1487
    %v1489 = vand.u32 %v1400, 4294901760
    %v1490 = vsub.f32 %v1400, %v1489
    %1491 = vmatmul.f32.gmra.mxu0 %v1490
    %v1492 = vpop.f32.mrf.mxu0
    %v1493 = vadd.f32 %v1464, %v1492
    %1494 = vdwg.mxu0
    %1495 = vmatpush.msra.mxu0 0.0
    %1496 = vmatpush.msra.mxu0 0.0
    %1497 = vmatpush.msra.mxu0 0.0
    %1498 = vmatpush.msra.mxu0 0.0
    %1499 = vmatpush.msra.mxu0 0.0
    %1500 = vmatpush.msra.mxu0 0.0
    %1501 = vmatpush.msra.mxu0 0.0
    %1502 = vmatpush.msra.mxu0 0.0
    %1503 = vmatpush.msra.mxu0 0.0
    %1504 = vmatpush.msra.mxu0 0.0
    %1505 = vmatpush.msra.mxu0 0.0
    %1506 = vmatpush.msra.mxu0 0.0
    %1507 = vmatpush.msra.mxu0 0.0
    %1508 = vmatpush.msra.mxu0 0.0
    %1509 = vmatpush.msra.mxu0 0.0
    %v1510 = vand.u32 %v765, 4294901760
    %1511 = vmatpush.msra.mxu0 %v1510
    %v1512 = vand.u32 %v1397, 4294901760
    %v1513 = vsub.f32 %v1397, %v1512
    %v1514 = vand.u32 %v1513, 4294901760
    %1515 = vmatmul.f32.gmra.mxu0 %v1514
    %v1516 = vpop.f32.mrf.mxu0
    %v1517 = vadd.f32 %v1488, %v1516
    %v1518 = vand.u32 %v1400, 4294901760
    %v1519 = vsub.f32 %v1400, %v1518
    %v1520 = vand.u32 %v1519, 4294901760
    %1521 = vmatmul.f32.gmra.mxu0 %v1520
    %v1522 = vpop.f32.mrf.mxu0
    %v1523 = vadd.f32 %v1493, %v1522
    %1524 = vdwg.mxu0
    %1525 = vmatpush.msra.mxu0 0.0
    %1526 = vmatpush.msra.mxu0 0.0
    %1527 = vmatpush.msra.mxu0 0.0
    %1528 = vmatpush.msra.mxu0 0.0
    %1529 = vmatpush.msra.mxu0 0.0
    %1530 = vmatpush.msra.mxu0 0.0
    %1531 = vmatpush.msra.mxu0 0.0
    %1532 = vmatpush.msra.mxu0 0.0
    %1533 = vmatpush.msra.mxu0 0.0
    %1534 = vmatpush.msra.mxu0 0.0
    %1535 = vmatpush.msra.mxu0 0.0
    %1536 = vmatpush.msra.mxu0 0.0
    %1537 = vmatpush.msra.mxu0 0.0
    %1538 = vmatpush.msra.mxu0 0.0
    %1539 = vmatpush.msra.mxu0 0.0
    %v1540 = vand.u32 %v765, 4294901760
    %v1541 = vsub.f32 %v765, %v1540
    %v1542 = vand.u32 %v1541, 4294901760
    %1543 = vmatpush.msra.mxu0 %v1542
    %v1544 = vand.u32 %v1397, 4294901760
    %1545 = vmatmul.f32.gmra.mxu0 %v1544
    %v1546 = vpop.f32.mrf.mxu0
    %v1547 = vadd.f32 %v1517, %v1546
    %v1548 = vand.u32 %v1400, 4294901760
    %1549 = vmatmul.f32.gmra.mxu0 %v1548
    %v1550 = vpop.f32.mrf.mxu0
    %v1551 = vadd.f32 %v1523, %v1550
    %1552 = vdwg.mxu0
    %1553 = vmatpush.msra.mxu0 0.0
    %1554 = vmatpush.msra.mxu0 0.0
    %1555 = vmatpush.msra.mxu0 0.0
    %1556 = vmatpush.msra.mxu0 0.0
    %1557 = vmatpush.msra.mxu0 0.0
    %1558 = vmatpush.msra.mxu0 0.0
    %1559 = vmatpush.msra.mxu0 0.0
    %1560 = vmatpush.msra.mxu0 0.0
    %1561 = vmatpush.msra.mxu0 0.0
    %1562 = vmatpush.msra.mxu0 0.0
    %1563 = vmatpush.msra.mxu0 0.0
    %1564 = vmatpush.msra.mxu0 0.0
    %1565 = vmatpush.msra.mxu0 0.0
    %1566 = vmatpush.msra.mxu0 0.0
    %1567 = vmatpush.msra.mxu0 0.0
    %v1568 = vand.u32 %v765, 4294901760
    %1569 = vmatpush.msra.mxu0 %v1568
    %v1570 = vand.u32 %v1397, 4294901760
    %1571 = vmatmul.f32.gmra.mxu0 %v1570
    %v1572 = vpop.f32.mrf.mxu0
    %v1573 = vadd.f32 %v1547, %v1572
    %v1574 = vand.u32 %v1400, 4294901760
    %1575 = vmatmul.f32.gmra.mxu0 %v1574
    %v1576 = vpop.f32.mrf.mxu0
    %v1577 = vadd.f32 %v1551, %v1576
    %1578 = vdwg.mxu0
    %1579 = vrot.lane.b32.xlu0 %v299, 112
    %v1580 = vpop.permute.xlu0 %1579
    %1581 = vrot.lane.b32.xlu0 %v303, 112
    %v1582 = vpop.permute.xlu0 %1581
    %1583 = vrot.lane.b32.xlu0 %v299, 88
    %v1584 = vpop.permute.xlu0 %1583
    %1585 = vrot.lane.b32.xlu0 %v303, 88
    %v1586 = vpop.permute.xlu0 %1585
    %v1587 = vsel %vm311, %v1580, 0
    %v1589 = vsel %vm311, %v1582, 0
    %v1591 = vsel %vm311, %v1584, 0
    %v1593 = vsel %vm311, %v1586, 0
    %1595 = vmatpush.xpose.msra.mxu0 0.0
    %1596 = vmatpush.xpose.msra.mxu0 0.0
    %1597 = vmatpush.xpose.msra.mxu0 0.0
    %1598 = vmatpush.xpose.msra.mxu0 0.0
    %1599 = vmatpush.xpose.msra.mxu0 0.0
    %1600 = vmatpush.xpose.msra.mxu0 0.0
    %1601 = vmatpush.xpose.msra.mxu0 0.0
    %1602 = vmatpush.xpose.msra.mxu0 0.0
    %1603 = vmatpush.xpose.msra.mxu0 0.0
    %1604 = vmatpush.xpose.msra.mxu0 0.0
    %1605 = vmatpush.xpose.msra.mxu0 0.0
    %1606 = vmatpush.xpose.msra.mxu0 0.0
    %1607 = vmatpush.xpose.msra.mxu0 0.0
    %1608 = vmatpush.xpose.msra.mxu0 0.0
    %v1609 = vand.u32 %v1593, 4294901760
    %1610 = vmatpush.xpose.msra.mxu0 %v1609
    %v1611 = vand.u32 %v1591, 4294901760
    %1612 = vmatpush.xpose.msra.mxu0 %v1611
    %v1613 = vand.u32 %v1587, 4294901760
    %v1614 = vsub.f32 %v1587, %v1613
    %v1615 = vand.u32 %v1614, 4294901760
    %v1616 = vsub.f32 %v1614, %v1615
    %v1617 = vand.u32 %v1616, 4294901760
    %1618 = vmatmul.f32.gmra.mxu0 %v1617
    %v1619 = vpop.f32.mrf.mxu0
    %v1620 = vadd.f32 0.0, %v1619
    %v1621 = vand.u32 %v1589, 4294901760
    %v1622 = vsub.f32 %v1589, %v1621
    %v1623 = vand.u32 %v1622, 4294901760
    %v1624 = vsub.f32 %v1622, %v1623
    %v1625 = vand.u32 %v1624, 4294901760
    %1626 = vmatmul.f32.gmra.mxu0 %v1625
    %v1627 = vpop.f32.mrf.mxu0
    %v1628 = vadd.f32 0.0, %v1627
    %1629 = vdwg.mxu0
    %1630 = vmatpush.xpose.msra.mxu0 0.0
    %1631 = vmatpush.xpose.msra.mxu0 0.0
    %1632 = vmatpush.xpose.msra.mxu0 0.0
    %1633 = vmatpush.xpose.msra.mxu0 0.0
    %1634 = vmatpush.xpose.msra.mxu0 0.0
    %1635 = vmatpush.xpose.msra.mxu0 0.0
    %1636 = vmatpush.xpose.msra.mxu0 0.0
    %1637 = vmatpush.xpose.msra.mxu0 0.0
    %1638 = vmatpush.xpose.msra.mxu0 0.0
    %1639 = vmatpush.xpose.msra.mxu0 0.0
    %1640 = vmatpush.xpose.msra.mxu0 0.0
    %1641 = vmatpush.xpose.msra.mxu0 0.0
    %1642 = vmatpush.xpose.msra.mxu0 0.0
    %1643 = vmatpush.xpose.msra.mxu0 0.0
    %v1644 = vand.u32 %v1593, 4294901760
    %v1645 = vsub.f32 %v1593, %v1644
    %v1646 = vand.u32 %v1645, 4294901760
    %v1647 = vsub.f32 %v1645, %v1646
    %v1648 = vand.u32 %v1647, 4294901760
    %1649 = vmatpush.xpose.msra.mxu0 %v1648
    %v1650 = vand.u32 %v1591, 4294901760
    %v1651 = vsub.f32 %v1591, %v1650
    %v1652 = vand.u32 %v1651, 4294901760
    %v1653 = vsub.f32 %v1651, %v1652
    %v1654 = vand.u32 %v1653, 4294901760
    %1655 = vmatpush.xpose.msra.mxu0 %v1654
    %v1656 = vand.u32 %v1587, 4294901760
    %1657 = vmatmul.f32.gmra.mxu0 %v1656
    %v1658 = vpop.f32.mrf.mxu0
    %v1659 = vadd.f32 %v1620, %v1658
    %v1660 = vand.u32 %v1589, 4294901760
    %1661 = vmatmul.f32.gmra.mxu0 %v1660
    %v1662 = vpop.f32.mrf.mxu0
    %v1663 = vadd.f32 %v1628, %v1662
    %1664 = vdwg.mxu0
    %1665 = vmatpush.xpose.msra.mxu0 0.0
    %1666 = vmatpush.xpose.msra.mxu0 0.0
    %1667 = vmatpush.xpose.msra.mxu0 0.0
    %1668 = vmatpush.xpose.msra.mxu0 0.0
    %1669 = vmatpush.xpose.msra.mxu0 0.0
    %1670 = vmatpush.xpose.msra.mxu0 0.0
    %1671 = vmatpush.xpose.msra.mxu0 0.0
    %1672 = vmatpush.xpose.msra.mxu0 0.0
    %1673 = vmatpush.xpose.msra.mxu0 0.0
    %1674 = vmatpush.xpose.msra.mxu0 0.0
    %1675 = vmatpush.xpose.msra.mxu0 0.0
    %1676 = vmatpush.xpose.msra.mxu0 0.0
    %1677 = vmatpush.xpose.msra.mxu0 0.0
    %1678 = vmatpush.xpose.msra.mxu0 0.0
    %v1679 = vand.u32 %v1593, 4294901760
    %v1680 = vsub.f32 %v1593, %v1679
    %1681 = vmatpush.xpose.msra.mxu0 %v1680
    %v1682 = vand.u32 %v1591, 4294901760
    %v1683 = vsub.f32 %v1591, %v1682
    %1684 = vmatpush.xpose.msra.mxu0 %v1683
    %v1685 = vand.u32 %v1587, 4294901760
    %v1686 = vsub.f32 %v1587, %v1685
    %1687 = vmatmul.f32.gmra.mxu0 %v1686
    %v1688 = vpop.f32.mrf.mxu0
    %v1689 = vadd.f32 %v1659, %v1688
    %v1690 = vand.u32 %v1589, 4294901760
    %v1691 = vsub.f32 %v1589, %v1690
    %1692 = vmatmul.f32.gmra.mxu0 %v1691
    %v1693 = vpop.f32.mrf.mxu0
    %v1694 = vadd.f32 %v1663, %v1693
    %1695 = vdwg.mxu0
    %1696 = vmatpush.xpose.msra.mxu0 0.0
    %1697 = vmatpush.xpose.msra.mxu0 0.0
    %1698 = vmatpush.xpose.msra.mxu0 0.0
    %1699 = vmatpush.xpose.msra.mxu0 0.0
    %1700 = vmatpush.xpose.msra.mxu0 0.0
    %1701 = vmatpush.xpose.msra.mxu0 0.0
    %1702 = vmatpush.xpose.msra.mxu0 0.0
    %1703 = vmatpush.xpose.msra.mxu0 0.0
    %1704 = vmatpush.xpose.msra.mxu0 0.0
    %1705 = vmatpush.xpose.msra.mxu0 0.0
    %1706 = vmatpush.xpose.msra.mxu0 0.0
    %1707 = vmatpush.xpose.msra.mxu0 0.0
    %1708 = vmatpush.xpose.msra.mxu0 0.0
    %1709 = vmatpush.xpose.msra.mxu0 0.0
    %v1710 = vand.u32 %v1593, 4294901760
    %1711 = vmatpush.xpose.msra.mxu0 %v1710
    %v1712 = vand.u32 %v1591, 4294901760
    %1713 = vmatpush.xpose.msra.mxu0 %v1712
    %v1714 = vand.u32 %v1587, 4294901760
    %v1715 = vsub.f32 %v1587, %v1714
    %v1716 = vand.u32 %v1715, 4294901760
    %1717 = vmatmul.f32.gmra.mxu0 %v1716
    %v1718 = vpop.f32.mrf.mxu0
    %v1719 = vadd.f32 %v1689, %v1718
    %v1720 = vand.u32 %v1589, 4294901760
    %v1721 = vsub.f32 %v1589, %v1720
    %v1722 = vand.u32 %v1721, 4294901760
    %1723 = vmatmul.f32.gmra.mxu0 %v1722
    %v1724 = vpop.f32.mrf.mxu0
    %v1725 = vadd.f32 %v1694, %v1724
    %1726 = vdwg.mxu0
    %1727 = vmatpush.xpose.msra.mxu0 0.0
    %1728 = vmatpush.xpose.msra.mxu0 0.0
    %1729 = vmatpush.xpose.msra.mxu0 0.0
    %1730 = vmatpush.xpose.msra.mxu0 0.0
    %1731 = vmatpush.xpose.msra.mxu0 0.0
    %1732 = vmatpush.xpose.msra.mxu0 0.0
    %1733 = vmatpush.xpose.msra.mxu0 0.0
    %1734 = vmatpush.xpose.msra.mxu0 0.0
    %1735 = vmatpush.xpose.msra.mxu0 0.0
    %1736 = vmatpush.xpose.msra.mxu0 0.0
    %1737 = vmatpush.xpose.msra.mxu0 0.0
    %1738 = vmatpush.xpose.msra.mxu0 0.0
    %1739 = vmatpush.xpose.msra.mxu0 0.0
    %1740 = vmatpush.xpose.msra.mxu0 0.0
    %v1741 = vand.u32 %v1593, 4294901760
    %v1742 = vsub.f32 %v1593, %v1741
    %v1743 = vand.u32 %v1742, 4294901760
    %1744 = vmatpush.xpose.msra.mxu0 %v1743
    %v1745 = vand.u32 %v1591, 4294901760
    %v1746 = vsub.f32 %v1591, %v1745
    %v1747 = vand.u32 %v1746, 4294901760
    %1748 = vmatpush.xpose.msra.mxu0 %v1747
    %v1749 = vand.u32 %v1587, 4294901760
    %1750 = vmatmul.f32.gmra.mxu0 %v1749
    %v1751 = vpop.f32.mrf.mxu0
    %v1752 = vadd.f32 %v1719, %v1751
    %v1753 = vand.u32 %v1589, 4294901760
    %1754 = vmatmul.f32.gmra.mxu0 %v1753
    %v1755 = vpop.f32.mrf.mxu0
    %v1756 = vadd.f32 %v1725, %v1755
    %1757 = vdwg.mxu0
    %1758 = vmatpush.xpose.msra.mxu0 0.0
    %1759 = vmatpush.xpose.msra.mxu0 0.0
    %1760 = vmatpush.xpose.msra.mxu0 0.0
    %1761 = vmatpush.xpose.msra.mxu0 0.0
    %1762 = vmatpush.xpose.msra.mxu0 0.0
    %1763 = vmatpush.xpose.msra.mxu0 0.0
    %1764 = vmatpush.xpose.msra.mxu0 0.0
    %1765 = vmatpush.xpose.msra.mxu0 0.0
    %1766 = vmatpush.xpose.msra.mxu0 0.0
    %1767 = vmatpush.xpose.msra.mxu0 0.0
    %1768 = vmatpush.xpose.msra.mxu0 0.0
    %1769 = vmatpush.xpose.msra.mxu0 0.0
    %1770 = vmatpush.xpose.msra.mxu0 0.0
    %1771 = vmatpush.xpose.msra.mxu0 0.0
    %v1772 = vand.u32 %v1593, 4294901760
    %1773 = vmatpush.xpose.msra.mxu0 %v1772
    %v1774 = vand.u32 %v1591, 4294901760
    %1775 = vmatpush.xpose.msra.mxu0 %v1774
    %v1776 = vand.u32 %v1587, 4294901760
    %1777 = vmatmul.f32.gmra.mxu0 %v1776
    %v1778 = vpop.f32.mrf.mxu0
    %v1779 = vadd.f32 %v1752, %v1778
    %v1780 = vand.u32 %v1589, 4294901760
    %1781 = vmatmul.f32.gmra.mxu0 %v1780
    %v1782 = vpop.f32.mrf.mxu0
    %v1783 = vadd.f32 %v1756, %v1782
    %1784 = vdwg.mxu0
    %v1785 = vmul.f32 %v1779, 0.35355338
    %v1786 = vmul.f32 %v1783, 0.35355338
    %v1787 = vadd.f32 %v1785, %v27
    %v1788 = vadd.f32 %v1786, %v28
    %v1789 = vsel %vm514, %v1787, -inf
    %1790 = vmax.xlane.f32.xlu0 %v1789
    %v1791 = vpop.xlane.xlu0 %1790
    %v1792 = vsel %vm514, %v1788, -inf
    %1793 = vmax.xlane.f32.xlu0 %v1792
    %v1794 = vpop.xlane.xlu0 %1793
    %v1795 = vsub.f32 %v1787, %v1791
    %v1796 = vsub.f32 %v1788, %v1794
    %v1797 = vmul.f32 %v1795, 1.442695
    %v1798 = vpow.pop %v1797
    %v1799 = vmul.f32 %v1796, 1.442695
    %v1800 = vpow.pop %v1799
    %v1801 = vsel %vm514, %v1798, 0.0
    %1802 = vadd.xlane.f32.xlu0 %v1801
    %v1803 = vpop.xlane.xlu0 %1802
    %v1804 = vsel %vm514, %v1800, 0.0
    %1805 = vadd.xlane.f32.xlu0 %v1804
    %v1806 = vpop.xlane.xlu0 %1805
    %v1807 = vrcp.pop %v1803
    %v1808 = vmul.f32 %v1803, %v1807
    %v1809 = vsub.f32 1.0, %v1808
    %v1810 = vmul.f32 %v1807, %v1809
    %v1811 = vadd.f32 %v1807, %v1810
    %vm1812 = vweird.f32 %v1803
    %vm1813 = vweird.f32 %v1807
    %vm1814 = vmor %vm1812, %vm1813
    %v1815 = vsel %vm1814, %v1807, %v1811
    %v1816 = vand.u32 2147483647, %v1803
    %vm1817 = vcmp.eq.f32.partialorder %v1816, 8.507059e+37
    %v1818 = vand.u32 %v1803, 2147483648
    %v1819 = vor.u32 1.1754944e-38, %v1818
    %v1820 = vsel %vm1817, %v1819, %v1815
    %v1821 = vmul.f32 %v1798, %v1820
    %v1822 = vrcp.pop %v1806
    %v1823 = vmul.f32 %v1806, %v1822
    %v1824 = vsub.f32 1.0, %v1823
    %v1825 = vmul.f32 %v1822, %v1824
    %v1826 = vadd.f32 %v1822, %v1825
    %vm1827 = vweird.f32 %v1806
    %vm1828 = vweird.f32 %v1822
    %vm1829 = vmor %vm1827, %vm1828
    %v1830 = vsel %vm1829, %v1822, %v1826
    %v1831 = vand.u32 2147483647, %v1806
    %vm1832 = vcmp.eq.f32.partialorder %v1831, 8.507059e+37
    %v1833 = vand.u32 %v1806, 2147483648
    %v1834 = vor.u32 1.1754944e-38, %v1833
    %v1835 = vsel %vm1832, %v1834, %v1830
    %v1836 = vmul.f32 %v1800, %v1835
    %1837 = vrot.lane.b32.xlu0 %v299, 72
    %v1838 = vpop.permute.xlu0 %1837
    %1839 = vrot.lane.b32.xlu0 %v303, 72
    %v1840 = vpop.permute.xlu0 %1839
    %v1844 = vsel %vm514, %v1821, 0
    %v1847 = vsel %vm514, %v1836, 0
    %1849 = vmatpush.msra.mxu0 0.0
    %1850 = vmatpush.msra.mxu0 0.0
    %1851 = vmatpush.msra.mxu0 0.0
    %1852 = vmatpush.msra.mxu0 0.0
    %1853 = vmatpush.msra.mxu0 0.0
    %1854 = vmatpush.msra.mxu0 0.0
    %1855 = vmatpush.msra.mxu0 0.0
    %1856 = vmatpush.msra.mxu0 0.0
    %1857 = vmatpush.msra.mxu0 0.0
    %1858 = vmatpush.msra.mxu0 0.0
    %1859 = vmatpush.msra.mxu0 0.0
    %1860 = vmatpush.msra.mxu0 0.0
    %1861 = vmatpush.msra.mxu0 0.0
    %1862 = vmatpush.msra.mxu0 0.0
    %v1863 = vand.u32 %v1840, 4294901760
    %1864 = vmatpush.msra.mxu0 %v1863
    %v1865 = vand.u32 %v1838, 4294901760
    %1866 = vmatpush.msra.mxu0 %v1865
    %v1867 = vand.u32 %v1844, 4294901760
    %v1868 = vsub.f32 %v1844, %v1867
    %v1869 = vand.u32 %v1868, 4294901760
    %v1870 = vsub.f32 %v1868, %v1869
    %v1871 = vand.u32 %v1870, 4294901760
    %1872 = vmatmul.f32.gmra.mxu0 %v1871
    %v1873 = vpop.f32.mrf.mxu0
    %v1874 = vadd.f32 0.0, %v1873
    %v1875 = vand.u32 %v1847, 4294901760
    %v1876 = vsub.f32 %v1847, %v1875
    %v1877 = vand.u32 %v1876, 4294901760
    %v1878 = vsub.f32 %v1876, %v1877
    %v1879 = vand.u32 %v1878, 4294901760
    %1880 = vmatmul.f32.gmra.mxu0 %v1879
    %v1881 = vpop.f32.mrf.mxu0
    %v1882 = vadd.f32 0.0, %v1881
    %1883 = vdwg.mxu0
    %1884 = vmatpush.msra.mxu0 0.0
    %1885 = vmatpush.msra.mxu0 0.0
    %1886 = vmatpush.msra.mxu0 0.0
    %1887 = vmatpush.msra.mxu0 0.0
    %1888 = vmatpush.msra.mxu0 0.0
    %1889 = vmatpush.msra.mxu0 0.0
    %1890 = vmatpush.msra.mxu0 0.0
    %1891 = vmatpush.msra.mxu0 0.0
    %1892 = vmatpush.msra.mxu0 0.0
    %1893 = vmatpush.msra.mxu0 0.0
    %1894 = vmatpush.msra.mxu0 0.0
    %1895 = vmatpush.msra.mxu0 0.0
    %1896 = vmatpush.msra.mxu0 0.0
    %1897 = vmatpush.msra.mxu0 0.0
    %v1898 = vand.u32 %v1840, 4294901760
    %v1899 = vsub.f32 %v1840, %v1898
    %v1900 = vand.u32 %v1899, 4294901760
    %v1901 = vsub.f32 %v1899, %v1900
    %v1902 = vand.u32 %v1901, 4294901760
    %1903 = vmatpush.msra.mxu0 %v1902
    %v1904 = vand.u32 %v1838, 4294901760
    %v1905 = vsub.f32 %v1838, %v1904
    %v1906 = vand.u32 %v1905, 4294901760
    %v1907 = vsub.f32 %v1905, %v1906
    %v1908 = vand.u32 %v1907, 4294901760
    %1909 = vmatpush.msra.mxu0 %v1908
    %v1910 = vand.u32 %v1844, 4294901760
    %1911 = vmatmul.f32.gmra.mxu0 %v1910
    %v1912 = vpop.f32.mrf.mxu0
    %v1913 = vadd.f32 %v1874, %v1912
    %v1914 = vand.u32 %v1847, 4294901760
    %1915 = vmatmul.f32.gmra.mxu0 %v1914
    %v1916 = vpop.f32.mrf.mxu0
    %v1917 = vadd.f32 %v1882, %v1916
    %1918 = vdwg.mxu0
    %1919 = vmatpush.msra.mxu0 0.0
    %1920 = vmatpush.msra.mxu0 0.0
    %1921 = vmatpush.msra.mxu0 0.0
    %1922 = vmatpush.msra.mxu0 0.0
    %1923 = vmatpush.msra.mxu0 0.0
    %1924 = vmatpush.msra.mxu0 0.0
    %1925 = vmatpush.msra.mxu0 0.0
    %1926 = vmatpush.msra.mxu0 0.0
    %1927 = vmatpush.msra.mxu0 0.0
    %1928 = vmatpush.msra.mxu0 0.0
    %1929 = vmatpush.msra.mxu0 0.0
    %1930 = vmatpush.msra.mxu0 0.0
    %1931 = vmatpush.msra.mxu0 0.0
    %1932 = vmatpush.msra.mxu0 0.0
    %v1933 = vand.u32 %v1840, 4294901760
    %v1934 = vsub.f32 %v1840, %v1933
    %1935 = vmatpush.msra.mxu0 %v1934
    %v1936 = vand.u32 %v1838, 4294901760
    %v1937 = vsub.f32 %v1838, %v1936
    %1938 = vmatpush.msra.mxu0 %v1937
    %v1939 = vand.u32 %v1844, 4294901760
    %v1940 = vsub.f32 %v1844, %v1939
    %1941 = vmatmul.f32.gmra.mxu0 %v1940
    %v1942 = vpop.f32.mrf.mxu0
    %v1943 = vadd.f32 %v1913, %v1942
    %v1944 = vand.u32 %v1847, 4294901760
    %v1945 = vsub.f32 %v1847, %v1944
    %1946 = vmatmul.f32.gmra.mxu0 %v1945
    %v1947 = vpop.f32.mrf.mxu0
    %v1948 = vadd.f32 %v1917, %v1947
    %1949 = vdwg.mxu0
    %1950 = vmatpush.msra.mxu0 0.0
    %1951 = vmatpush.msra.mxu0 0.0
    %1952 = vmatpush.msra.mxu0 0.0
    %1953 = vmatpush.msra.mxu0 0.0
    %1954 = vmatpush.msra.mxu0 0.0
    %1955 = vmatpush.msra.mxu0 0.0
    %1956 = vmatpush.msra.mxu0 0.0
    %1957 = vmatpush.msra.mxu0 0.0
    %1958 = vmatpush.msra.mxu0 0.0
    %1959 = vmatpush.msra.mxu0 0.0
    %1960 = vmatpush.msra.mxu0 0.0
    %1961 = vmatpush.msra.mxu0 0.0
    %1962 = vmatpush.msra.mxu0 0.0
    %1963 = vmatpush.msra.mxu0 0.0
    %v1964 = vand.u32 %v1840, 4294901760
    %1965 = vmatpush.msra.mxu0 %v1964
    %v1966 = vand.u32 %v1838, 4294901760
    %1967 = vmatpush.msra.mxu0 %v1966
    %v1968 = vand.u32 %v1844, 4294901760
    %v1969 = vsub.f32 %v1844, %v1968
    %v1970 = vand.u32 %v1969, 4294901760
    %1971 = vmatmul.f32.gmra.mxu0 %v1970
    %v1972 = vpop.f32.mrf.mxu0
    %v1973 = vadd.f32 %v1943, %v1972
    %v1974 = vand.u32 %v1847, 4294901760
    %v1975 = vsub.f32 %v1847, %v1974
    %v1976 = vand.u32 %v1975, 4294901760
    %1977 = vmatmul.f32.gmra.mxu0 %v1976
    %v1978 = vpop.f32.mrf.mxu0
    %v1979 = vadd.f32 %v1948, %v1978
    %1980 = vdwg.mxu0
    %1981 = vmatpush.msra.mxu0 0.0
    %1982 = vmatpush.msra.mxu0 0.0
    %1983 = vmatpush.msra.mxu0 0.0
    %1984 = vmatpush.msra.mxu0 0.0
    %1985 = vmatpush.msra.mxu0 0.0
    %1986 = vmatpush.msra.mxu0 0.0
    %1987 = vmatpush.msra.mxu0 0.0
    %1988 = vmatpush.msra.mxu0 0.0
    %1989 = vmatpush.msra.mxu0 0.0
    %1990 = vmatpush.msra.mxu0 0.0
    %1991 = vmatpush.msra.mxu0 0.0
    %1992 = vmatpush.msra.mxu0 0.0
    %1993 = vmatpush.msra.mxu0 0.0
    %1994 = vmatpush.msra.mxu0 0.0
    %v1995 = vand.u32 %v1840, 4294901760
    %v1996 = vsub.f32 %v1840, %v1995
    %v1997 = vand.u32 %v1996, 4294901760
    %1998 = vmatpush.msra.mxu0 %v1997
    %v1999 = vand.u32 %v1838, 4294901760
    %v2000 = vsub.f32 %v1838, %v1999
    %v2001 = vand.u32 %v2000, 4294901760
    %2002 = vmatpush.msra.mxu0 %v2001
    %v2003 = vand.u32 %v1844, 4294901760
    %2004 = vmatmul.f32.gmra.mxu0 %v2003
    %v2005 = vpop.f32.mrf.mxu0
    %v2006 = vadd.f32 %v1973, %v2005
    %v2007 = vand.u32 %v1847, 4294901760
    %2008 = vmatmul.f32.gmra.mxu0 %v2007
    %v2009 = vpop.f32.mrf.mxu0
    %v2010 = vadd.f32 %v1979, %v2009
    %2011 = vdwg.mxu0
    %2012 = vmatpush.msra.mxu0 0.0
    %2013 = vmatpush.msra.mxu0 0.0
    %2014 = vmatpush.msra.mxu0 0.0
    %2015 = vmatpush.msra.mxu0 0.0
    %2016 = vmatpush.msra.mxu0 0.0
    %2017 = vmatpush.msra.mxu0 0.0
    %2018 = vmatpush.msra.mxu0 0.0
    %2019 = vmatpush.msra.mxu0 0.0
    %2020 = vmatpush.msra.mxu0 0.0
    %2021 = vmatpush.msra.mxu0 0.0
    %2022 = vmatpush.msra.mxu0 0.0
    %2023 = vmatpush.msra.mxu0 0.0
    %2024 = vmatpush.msra.mxu0 0.0
    %2025 = vmatpush.msra.mxu0 0.0
    %v2026 = vand.u32 %v1840, 4294901760
    %2027 = vmatpush.msra.mxu0 %v2026
    %v2028 = vand.u32 %v1838, 4294901760
    %2029 = vmatpush.msra.mxu0 %v2028
    %v2030 = vand.u32 %v1844, 4294901760
    %2031 = vmatmul.f32.gmra.mxu0 %v2030
    %v2032 = vpop.f32.mrf.mxu0
    %v2033 = vadd.f32 %v2006, %v2032
    %v2034 = vand.u32 %v1847, 4294901760
    %2035 = vmatmul.f32.gmra.mxu0 %v2034
    %v2036 = vpop.f32.mrf.mxu0
    %v2037 = vadd.f32 %v2010, %v2036
    %2038 = vdwg.mxu0
    %v2039 = vld [vmem:[%s3 + $0x10] sm:$0xff]
    %v2041 = vsel %vm311, %v2033, 0
    %v2044 = vsel %vm311, %v2037, 0
    %2046 = vmatpush.msra.mxu0 0.0
    %2047 = vmatpush.msra.mxu0 0.0
    %2048 = vmatpush.msra.mxu0 0.0
    %2049 = vmatpush.msra.mxu0 0.0
    %2050 = vmatpush.msra.mxu0 0.0
    %2051 = vmatpush.msra.mxu0 0.0
    %2052 = vmatpush.msra.mxu0 0.0
    %2053 = vmatpush.msra.mxu0 0.0
    %2054 = vmatpush.msra.mxu0 0.0
    %2055 = vmatpush.msra.mxu0 0.0
    %2056 = vmatpush.msra.mxu0 0.0
    %2057 = vmatpush.msra.mxu0 0.0
    %2058 = vmatpush.msra.mxu0 0.0
    %2059 = vmatpush.msra.mxu0 0.0
    %2060 = vmatpush.msra.mxu0 0.0
    %v2061 = vand.u32 %v2039, 4294901760
    %2062 = vmatpush.msra.mxu0 %v2061
    %v2063 = vand.u32 %v2041, 4294901760
    %v2064 = vsub.f32 %v2041, %v2063
    %v2065 = vand.u32 %v2064, 4294901760
    %v2066 = vsub.f32 %v2064, %v2065
    %v2067 = vand.u32 %v2066, 4294901760
    %2068 = vmatmul.f32.gmra.mxu0 %v2067
    %v2069 = vpop.f32.mrf.mxu0
    %v2070 = vadd.f32 0.0, %v2069
    %v2071 = vand.u32 %v2044, 4294901760
    %v2072 = vsub.f32 %v2044, %v2071
    %v2073 = vand.u32 %v2072, 4294901760
    %v2074 = vsub.f32 %v2072, %v2073
    %v2075 = vand.u32 %v2074, 4294901760
    %2076 = vmatmul.f32.gmra.mxu0 %v2075
    %v2077 = vpop.f32.mrf.mxu0
    %v2078 = vadd.f32 0.0, %v2077
    %2079 = vdwg.mxu0
    %2080 = vmatpush.msra.mxu0 0.0
    %2081 = vmatpush.msra.mxu0 0.0
    %2082 = vmatpush.msra.mxu0 0.0
    %2083 = vmatpush.msra.mxu0 0.0
    %2084 = vmatpush.msra.mxu0 0.0
    %2085 = vmatpush.msra.mxu0 0.0
    %2086 = vmatpush.msra.mxu0 0.0
    %2087 = vmatpush.msra.mxu0 0.0
    %2088 = vmatpush.msra.mxu0 0.0
    %2089 = vmatpush.msra.mxu0 0.0
    %2090 = vmatpush.msra.mxu0 0.0
    %2091 = vmatpush.msra.mxu0 0.0
    %2092 = vmatpush.msra.mxu0 0.0
    %2093 = vmatpush.msra.mxu0 0.0
    %2094 = vmatpush.msra.mxu0 0.0
    %v2095 = vand.u32 %v2039, 4294901760
    %v2096 = vsub.f32 %v2039, %v2095
    %v2097 = vand.u32 %v2096, 4294901760
    %v2098 = vsub.f32 %v2096, %v2097
    %v2099 = vand.u32 %v2098, 4294901760
    %2100 = vmatpush.msra.mxu0 %v2099
    %v2101 = vand.u32 %v2041, 4294901760
    %2102 = vmatmul.f32.gmra.mxu0 %v2101
    %v2103 = vpop.f32.mrf.mxu0
    %v2104 = vadd.f32 %v2070, %v2103
    %v2105 = vand.u32 %v2044, 4294901760
    %2106 = vmatmul.f32.gmra.mxu0 %v2105
    %v2107 = vpop.f32.mrf.mxu0
    %v2108 = vadd.f32 %v2078, %v2107
    %2109 = vdwg.mxu0
    %2110 = vmatpush.msra.mxu0 0.0
    %2111 = vmatpush.msra.mxu0 0.0
    %2112 = vmatpush.msra.mxu0 0.0
    %2113 = vmatpush.msra.mxu0 0.0
    %2114 = vmatpush.msra.mxu0 0.0
    %2115 = vmatpush.msra.mxu0 0.0
    %2116 = vmatpush.msra.mxu0 0.0
    %2117 = vmatpush.msra.mxu0 0.0
    %2118 = vmatpush.msra.mxu0 0.0
    %2119 = vmatpush.msra.mxu0 0.0
    %2120 = vmatpush.msra.mxu0 0.0
    %2121 = vmatpush.msra.mxu0 0.0
    %2122 = vmatpush.msra.mxu0 0.0
    %2123 = vmatpush.msra.mxu0 0.0
    %2124 = vmatpush.msra.mxu0 0.0
    %v2125 = vand.u32 %v2039, 4294901760
    %v2126 = vsub.f32 %v2039, %v2125
    %2127 = vmatpush.msra.mxu0 %v2126
    %v2128 = vand.u32 %v2041, 4294901760
    %v2129 = vsub.f32 %v2041, %v2128
    %2130 = vmatmul.f32.gmra.mxu0 %v2129
    %v2131 = vpop.f32.mrf.mxu0
    %v2132 = vadd.f32 %v2104, %v2131
    %v2133 = vand.u32 %v2044, 4294901760
    %v2134 = vsub.f32 %v2044, %v2133
    %2135 = vmatmul.f32.gmra.mxu0 %v2134
    %v2136 = vpop.f32.mrf.mxu0
    %v2137 = vadd.f32 %v2108, %v2136
    %2138 = vdwg.mxu0
    %2139 = vmatpush.msra.mxu0 0.0
    %2140 = vmatpush.msra.mxu0 0.0
    %2141 = vmatpush.msra.mxu0 0.0
    %2142 = vmatpush.msra.mxu0 0.0
    %2143 = vmatpush.msra.mxu0 0.0
    %2144 = vmatpush.msra.mxu0 0.0
    %2145 = vmatpush.msra.mxu0 0.0
    %2146 = vmatpush.msra.mxu0 0.0
    %2147 = vmatpush.msra.mxu0 0.0
    %2148 = vmatpush.msra.mxu0 0.0
    %2149 = vmatpush.msra.mxu0 0.0
    %2150 = vmatpush.msra.mxu0 0.0
    %2151 = vmatpush.msra.mxu0 0.0
    %2152 = vmatpush.msra.mxu0 0.0
    %2153 = vmatpush.msra.mxu0 0.0
    %v2154 = vand.u32 %v2039, 4294901760
    %2155 = vmatpush.msra.mxu0 %v2154
    %v2156 = vand.u32 %v2041, 4294901760
    %v2157 = vsub.f32 %v2041, %v2156
    %v2158 = vand.u32 %v2157, 4294901760
    %2159 = vmatmul.f32.gmra.mxu0 %v2158
    %v2160 = vpop.f32.mrf.mxu0
    %v2161 = vadd.f32 %v2132, %v2160
    %v2162 = vand.u32 %v2044, 4294901760
    %v2163 = vsub.f32 %v2044, %v2162
    %v2164 = vand.u32 %v2163, 4294901760
    %2165 = vmatmul.f32.gmra.mxu0 %v2164
    %v2166 = vpop.f32.mrf.mxu0
    %v2167 = vadd.f32 %v2137, %v2166
    %2168 = vdwg.mxu0
    %2169 = vmatpush.msra.mxu0 0.0
    %2170 = vmatpush.msra.mxu0 0.0
    %2171 = vmatpush.msra.mxu0 0.0
    %2172 = vmatpush.msra.mxu0 0.0
    %2173 = vmatpush.msra.mxu0 0.0
    %2174 = vmatpush.msra.mxu0 0.0
    %2175 = vmatpush.msra.mxu0 0.0
    %2176 = vmatpush.msra.mxu0 0.0
    %2177 = vmatpush.msra.mxu0 0.0
    %2178 = vmatpush.msra.mxu0 0.0
    %2179 = vmatpush.msra.mxu0 0.0
    %2180 = vmatpush.msra.mxu0 0.0
    %2181 = vmatpush.msra.mxu0 0.0
    %2182 = vmatpush.msra.mxu0 0.0
    %2183 = vmatpush.msra.mxu0 0.0
    %v2184 = vand.u32 %v2039, 4294901760
    %v2185 = vsub.f32 %v2039, %v2184
    %v2186 = vand.u32 %v2185, 4294901760
    %2187 = vmatpush.msra.mxu0 %v2186
    %v2188 = vand.u32 %v2041, 4294901760
    %2189 = vmatmul.f32.gmra.mxu0 %v2188
    %v2190 = vpop.f32.mrf.mxu0
    %v2191 = vadd.f32 %v2161, %v2190
    %v2192 = vand.u32 %v2044, 4294901760
    %2193 = vmatmul.f32.gmra.mxu0 %v2192
    %v2194 = vpop.f32.mrf.mxu0
    %v2195 = vadd.f32 %v2167, %v2194
    %2196 = vdwg.mxu0
    %2197 = vmatpush.msra.mxu0 0.0
    %2198 = vmatpush.msra.mxu0 0.0
    %2199 = vmatpush.msra.mxu0 0.0
    %2200 = vmatpush.msra.mxu0 0.0
    %2201 = vmatpush.msra.mxu0 0.0
    %2202 = vmatpush.msra.mxu0 0.0
    %2203 = vmatpush.msra.mxu0 0.0
    %2204 = vmatpush.msra.mxu0 0.0
    %2205 = vmatpush.msra.mxu0 0.0
    %2206 = vmatpush.msra.mxu0 0.0
    %2207 = vmatpush.msra.mxu0 0.0
    %2208 = vmatpush.msra.mxu0 0.0
    %2209 = vmatpush.msra.mxu0 0.0
    %2210 = vmatpush.msra.mxu0 0.0
    %2211 = vmatpush.msra.mxu0 0.0
    %v2212 = vand.u32 %v2039, 4294901760
    %2213 = vmatpush.msra.mxu0 %v2212
    %v2214 = vand.u32 %v2041, 4294901760
    %2215 = vmatmul.f32.gmra.mxu0 %v2214
    %v2216 = vpop.f32.mrf.mxu0
    %v2217 = vadd.f32 %v2191, %v2216
    %v2218 = vand.u32 %v2044, 4294901760
    %2219 = vmatmul.f32.gmra.mxu0 %v2218
    %v2220 = vpop.f32.mrf.mxu0
    %v2221 = vadd.f32 %v2195, %v2220
    %2222 = vdwg.mxu0
    %v2223 = vadd.f32 %v1573, %v2217
    %v2224 = vadd.f32 %v1577, %v2221
    %2225 = vrot.lane.b32.xlu0 %v299, 104
    %v2226 = vpop.permute.xlu0 %2225
    %2227 = vrot.lane.b32.xlu0 %v303, 104
    %v2228 = vpop.permute.xlu0 %2227
    %v2229 = vsel %vm311, %v2226, 0
    %v2231 = vsel %vm311, %v2228, 0
    %2233 = vmatpush.xpose.msra.mxu0 0.0
    %2234 = vmatpush.xpose.msra.mxu0 0.0
    %2235 = vmatpush.xpose.msra.mxu0 0.0
    %2236 = vmatpush.xpose.msra.mxu0 0.0
    %2237 = vmatpush.xpose.msra.mxu0 0.0
    %2238 = vmatpush.xpose.msra.mxu0 0.0
    %2239 = vmatpush.xpose.msra.mxu0 0.0
    %2240 = vmatpush.xpose.msra.mxu0 0.0
    %2241 = vmatpush.xpose.msra.mxu0 0.0
    %2242 = vmatpush.xpose.msra.mxu0 0.0
    %2243 = vmatpush.xpose.msra.mxu0 0.0
    %2244 = vmatpush.xpose.msra.mxu0 0.0
    %2245 = vmatpush.xpose.msra.mxu0 0.0
    %2246 = vmatpush.xpose.msra.mxu0 0.0
    %v2247 = vand.u32 %v1593, 4294901760
    %2248 = vmatpush.xpose.msra.mxu0 %v2247
    %v2249 = vand.u32 %v1591, 4294901760
    %2250 = vmatpush.xpose.msra.mxu0 %v2249
    %v2251 = vand.u32 %v2229, 4294901760
    %v2252 = vsub.f32 %v2229, %v2251
    %v2253 = vand.u32 %v2252, 4294901760
    %v2254 = vsub.f32 %v2252, %v2253
    %v2255 = vand.u32 %v2254, 4294901760
    %2256 = vmatmul.f32.gmra.mxu0 %v2255
    %v2257 = vpop.f32.mrf.mxu0
    %v2258 = vadd.f32 0.0, %v2257
    %v2259 = vand.u32 %v2231, 4294901760
    %v2260 = vsub.f32 %v2231, %v2259
    %v2261 = vand.u32 %v2260, 4294901760
    %v2262 = vsub.f32 %v2260, %v2261
    %v2263 = vand.u32 %v2262, 4294901760
    %2264 = vmatmul.f32.gmra.mxu0 %v2263
    %v2265 = vpop.f32.mrf.mxu0
    %v2266 = vadd.f32 0.0, %v2265
    %2267 = vdwg.mxu0
    %2268 = vmatpush.xpose.msra.mxu0 0.0
    %2269 = vmatpush.xpose.msra.mxu0 0.0
    %2270 = vmatpush.xpose.msra.mxu0 0.0
    %2271 = vmatpush.xpose.msra.mxu0 0.0
    %2272 = vmatpush.xpose.msra.mxu0 0.0
    %2273 = vmatpush.xpose.msra.mxu0 0.0
    %2274 = vmatpush.xpose.msra.mxu0 0.0
    %2275 = vmatpush.xpose.msra.mxu0 0.0
    %2276 = vmatpush.xpose.msra.mxu0 0.0
    %2277 = vmatpush.xpose.msra.mxu0 0.0
    %2278 = vmatpush.xpose.msra.mxu0 0.0
    %2279 = vmatpush.xpose.msra.mxu0 0.0
    %2280 = vmatpush.xpose.msra.mxu0 0.0
    %2281 = vmatpush.xpose.msra.mxu0 0.0
    %v2282 = vand.u32 %v1593, 4294901760
    %v2283 = vsub.f32 %v1593, %v2282
    %v2284 = vand.u32 %v2283, 4294901760
    %v2285 = vsub.f32 %v2283, %v2284
    %v2286 = vand.u32 %v2285, 4294901760
    %2287 = vmatpush.xpose.msra.mxu0 %v2286
    %v2288 = vand.u32 %v1591, 4294901760
    %v2289 = vsub.f32 %v1591, %v2288
    %v2290 = vand.u32 %v2289, 4294901760
    %v2291 = vsub.f32 %v2289, %v2290
    %v2292 = vand.u32 %v2291, 4294901760
    %2293 = vmatpush.xpose.msra.mxu0 %v2292
    %v2294 = vand.u32 %v2229, 4294901760
    %2295 = vmatmul.f32.gmra.mxu0 %v2294
    %v2296 = vpop.f32.mrf.mxu0
    %v2297 = vadd.f32 %v2258, %v2296
    %v2298 = vand.u32 %v2231, 4294901760
    %2299 = vmatmul.f32.gmra.mxu0 %v2298
    %v2300 = vpop.f32.mrf.mxu0
    %v2301 = vadd.f32 %v2266, %v2300
    %2302 = vdwg.mxu0
    %2303 = vmatpush.xpose.msra.mxu0 0.0
    %2304 = vmatpush.xpose.msra.mxu0 0.0
    %2305 = vmatpush.xpose.msra.mxu0 0.0
    %2306 = vmatpush.xpose.msra.mxu0 0.0
    %2307 = vmatpush.xpose.msra.mxu0 0.0
    %2308 = vmatpush.xpose.msra.mxu0 0.0
    %2309 = vmatpush.xpose.msra.mxu0 0.0
    %2310 = vmatpush.xpose.msra.mxu0 0.0
    %2311 = vmatpush.xpose.msra.mxu0 0.0
    %2312 = vmatpush.xpose.msra.mxu0 0.0
    %2313 = vmatpush.xpose.msra.mxu0 0.0
    %2314 = vmatpush.xpose.msra.mxu0 0.0
    %2315 = vmatpush.xpose.msra.mxu0 0.0
    %2316 = vmatpush.xpose.msra.mxu0 0.0
    %v2317 = vand.u32 %v1593, 4294901760
    %v2318 = vsub.f32 %v1593, %v2317
    %2319 = vmatpush.xpose.msra.mxu0 %v2318
    %v2320 = vand.u32 %v1591, 4294901760
    %v2321 = vsub.f32 %v1591, %v2320
    %2322 = vmatpush.xpose.msra.mxu0 %v2321
    %v2323 = vand.u32 %v2229, 4294901760
    %v2324 = vsub.f32 %v2229, %v2323
    %2325 = vmatmul.f32.gmra.mxu0 %v2324
    %v2326 = vpop.f32.mrf.mxu0
    %v2327 = vadd.f32 %v2297, %v2326
    %v2328 = vand.u32 %v2231, 4294901760
    %v2329 = vsub.f32 %v2231, %v2328
    %2330 = vmatmul.f32.gmra.mxu0 %v2329
    %v2331 = vpop.f32.mrf.mxu0
    %v2332 = vadd.f32 %v2301, %v2331
    %2333 = vdwg.mxu0
    %2334 = vmatpush.xpose.msra.mxu0 0.0
    %2335 = vmatpush.xpose.msra.mxu0 0.0
    %2336 = vmatpush.xpose.msra.mxu0 0.0
    %2337 = vmatpush.xpose.msra.mxu0 0.0
    %2338 = vmatpush.xpose.msra.mxu0 0.0
    %2339 = vmatpush.xpose.msra.mxu0 0.0
    %2340 = vmatpush.xpose.msra.mxu0 0.0
    %2341 = vmatpush.xpose.msra.mxu0 0.0
    %2342 = vmatpush.xpose.msra.mxu0 0.0
    %2343 = vmatpush.xpose.msra.mxu0 0.0
    %2344 = vmatpush.xpose.msra.mxu0 0.0
    %2345 = vmatpush.xpose.msra.mxu0 0.0
    %2346 = vmatpush.xpose.msra.mxu0 0.0
    %2347 = vmatpush.xpose.msra.mxu0 0.0
    %v2348 = vand.u32 %v1593, 4294901760
    %2349 = vmatpush.xpose.msra.mxu0 %v2348
    %v2350 = vand.u32 %v1591, 4294901760
    %2351 = vmatpush.xpose.msra.mxu0 %v2350
    %v2352 = vand.u32 %v2229, 4294901760
    %v2353 = vsub.f32 %v2229, %v2352
    %v2354 = vand.u32 %v2353, 4294901760
    %2355 = vmatmul.f32.gmra.mxu0 %v2354
    %v2356 = vpop.f32.mrf.mxu0
    %v2357 = vadd.f32 %v2327, %v2356
    %v2358 = vand.u32 %v2231, 4294901760
    %v2359 = vsub.f32 %v2231, %v2358
    %v2360 = vand.u32 %v2359, 4294901760
    %2361 = vmatmul.f32.gmra.mxu0 %v2360
    %v2362 = vpop.f32.mrf.mxu0
    %v2363 = vadd.f32 %v2332, %v2362
    %2364 = vdwg.mxu0
    %2365 = vmatpush.xpose.msra.mxu0 0.0
    %2366 = vmatpush.xpose.msra.mxu0 0.0
    %2367 = vmatpush.xpose.msra.mxu0 0.0
    %2368 = vmatpush.xpose.msra.mxu0 0.0
    %2369 = vmatpush.xpose.msra.mxu0 0.0
    %2370 = vmatpush.xpose.msra.mxu0 0.0
    %2371 = vmatpush.xpose.msra.mxu0 0.0
    %2372 = vmatpush.xpose.msra.mxu0 0.0
    %2373 = vmatpush.xpose.msra.mxu0 0.0
    %2374 = vmatpush.xpose.msra.mxu0 0.0
    %2375 = vmatpush.xpose.msra.mxu0 0.0
    %2376 = vmatpush.xpose.msra.mxu0 0.0
    %2377 = vmatpush.xpose.msra.mxu0 0.0
    %2378 = vmatpush.xpose.msra.mxu0 0.0
    %v2379 = vand.u32 %v1593, 4294901760
    %v2380 = vsub.f32 %v1593, %v2379
    %v2381 = vand.u32 %v2380, 4294901760
    %2382 = vmatpush.xpose.msra.mxu0 %v2381
    %v2383 = vand.u32 %v1591, 4294901760
    %v2384 = vsub.f32 %v1591, %v2383
    %v2385 = vand.u32 %v2384, 4294901760
    %2386 = vmatpush.xpose.msra.mxu0 %v2385
    %v2387 = vand.u32 %v2229, 4294901760
    %2388 = vmatmul.f32.gmra.mxu0 %v2387
    %v2389 = vpop.f32.mrf.mxu0
    %v2390 = vadd.f32 %v2357, %v2389
    %v2391 = vand.u32 %v2231, 4294901760
    %2392 = vmatmul.f32.gmra.mxu0 %v2391
    %v2393 = vpop.f32.mrf.mxu0
    %v2394 = vadd.f32 %v2363, %v2393
    %2395 = vdwg.mxu0
    %2396 = vmatpush.xpose.msra.mxu0 0.0
    %2397 = vmatpush.xpose.msra.mxu0 0.0
    %2398 = vmatpush.xpose.msra.mxu0 0.0
    %2399 = vmatpush.xpose.msra.mxu0 0.0
    %2400 = vmatpush.xpose.msra.mxu0 0.0
    %2401 = vmatpush.xpose.msra.mxu0 0.0
    %2402 = vmatpush.xpose.msra.mxu0 0.0
    %2403 = vmatpush.xpose.msra.mxu0 0.0
    %2404 = vmatpush.xpose.msra.mxu0 0.0
    %2405 = vmatpush.xpose.msra.mxu0 0.0
    %2406 = vmatpush.xpose.msra.mxu0 0.0
    %2407 = vmatpush.xpose.msra.mxu0 0.0
    %2408 = vmatpush.xpose.msra.mxu0 0.0
    %2409 = vmatpush.xpose.msra.mxu0 0.0
    %v2410 = vand.u32 %v1593, 4294901760
    %2411 = vmatpush.xpose.msra.mxu0 %v2410
    %v2412 = vand.u32 %v1591, 4294901760
    %2413 = vmatpush.xpose.msra.mxu0 %v2412
    %v2414 = vand.u32 %v2229, 4294901760
    %2415 = vmatmul.f32.gmra.mxu0 %v2414
    %v2416 = vpop.f32.mrf.mxu0
    %v2417 = vadd.f32 %v2390, %v2416
    %v2418 = vand.u32 %v2231, 4294901760
    %2419 = vmatmul.f32.gmra.mxu0 %v2418
    %v2420 = vpop.f32.mrf.mxu0
    %v2421 = vadd.f32 %v2394, %v2420
    %2422 = vdwg.mxu0
    %v2423 = vmul.f32 %v2417, 0.35355338
    %v2424 = vmul.f32 %v2421, 0.35355338
    %v2425 = vadd.f32 %v2423, %v27
    %v2426 = vadd.f32 %v2424, %v28
    %v2427 = vsel %vm514, %v2425, -inf
    %2428 = vmax.xlane.f32.xlu0 %v2427
    %v2429 = vpop.xlane.xlu0 %2428
    %v2430 = vsel %vm514, %v2426, -inf
    %2431 = vmax.xlane.f32.xlu0 %v2430
    %v2432 = vpop.xlane.xlu0 %2431
    %v2433 = vsub.f32 %v2425, %v2429
    %v2434 = vsub.f32 %v2426, %v2432
    %v2435 = vmul.f32 %v2433, 1.442695
    %v2436 = vpow.pop %v2435
    %v2437 = vmul.f32 %v2434, 1.442695
    %v2438 = vpow.pop %v2437
    %v2439 = vsel %vm514, %v2436, 0.0
    %2440 = vadd.xlane.f32.xlu0 %v2439
    %v2441 = vpop.xlane.xlu0 %2440
    %v2442 = vsel %vm514, %v2438, 0.0
    %2443 = vadd.xlane.f32.xlu0 %v2442
    %v2444 = vpop.xlane.xlu0 %2443
    %v2445 = vrcp.pop %v2441
    %v2446 = vmul.f32 %v2441, %v2445
    %v2447 = vsub.f32 1.0, %v2446
    %v2448 = vmul.f32 %v2445, %v2447
    %v2449 = vadd.f32 %v2445, %v2448
    %vm2450 = vweird.f32 %v2441
    %vm2451 = vweird.f32 %v2445
    %vm2452 = vmor %vm2450, %vm2451
    %v2453 = vsel %vm2452, %v2445, %v2449
    %v2454 = vand.u32 2147483647, %v2441
    %vm2455 = vcmp.eq.f32.partialorder %v2454, 8.507059e+37
    %v2456 = vand.u32 %v2441, 2147483648
    %v2457 = vor.u32 1.1754944e-38, %v2456
    %v2458 = vsel %vm2455, %v2457, %v2453
    %v2459 = vmul.f32 %v2436, %v2458
    %v2460 = vrcp.pop %v2444
    %v2461 = vmul.f32 %v2444, %v2460
    %v2462 = vsub.f32 1.0, %v2461
    %v2463 = vmul.f32 %v2460, %v2462
    %v2464 = vadd.f32 %v2460, %v2463
    %vm2465 = vweird.f32 %v2444
    %vm2466 = vweird.f32 %v2460
    %vm2467 = vmor %vm2465, %vm2466
    %v2468 = vsel %vm2467, %v2460, %v2464
    %v2469 = vand.u32 2147483647, %v2444
    %vm2470 = vcmp.eq.f32.partialorder %v2469, 8.507059e+37
    %v2471 = vand.u32 %v2444, 2147483648
    %v2472 = vor.u32 1.1754944e-38, %v2471
    %v2473 = vsel %vm2470, %v2472, %v2468
    %v2474 = vmul.f32 %v2438, %v2473
    %v2476 = vsel %vm514, %v2459, 0
    %v2479 = vsel %vm514, %v2474, 0
    %2481 = vmatpush.msra.mxu0 0.0
    %2482 = vmatpush.msra.mxu0 0.0
    %2483 = vmatpush.msra.mxu0 0.0
    %2484 = vmatpush.msra.mxu0 0.0
    %2485 = vmatpush.msra.mxu0 0.0
    %2486 = vmatpush.msra.mxu0 0.0
    %2487 = vmatpush.msra.mxu0 0.0
    %2488 = vmatpush.msra.mxu0 0.0
    %2489 = vmatpush.msra.mxu0 0.0
    %2490 = vmatpush.msra.mxu0 0.0
    %2491 = vmatpush.msra.mxu0 0.0
    %2492 = vmatpush.msra.mxu0 0.0
    %2493 = vmatpush.msra.mxu0 0.0
    %2494 = vmatpush.msra.mxu0 0.0
    %v2495 = vand.u32 %v1840, 4294901760
    %2496 = vmatpush.msra.mxu0 %v2495
    %v2497 = vand.u32 %v1838, 4294901760
    %2498 = vmatpush.msra.mxu0 %v2497
    %v2499 = vand.u32 %v2476, 4294901760
    %v2500 = vsub.f32 %v2476, %v2499
    %v2501 = vand.u32 %v2500, 4294901760
    %v2502 = vsub.f32 %v2500, %v2501
    %v2503 = vand.u32 %v2502, 4294901760
    %2504 = vmatmul.f32.gmra.mxu0 %v2503
    %v2505 = vpop.f32.mrf.mxu0
    %v2506 = vadd.f32 0.0, %v2505
    %v2507 = vand.u32 %v2479, 4294901760
    %v2508 = vsub.f32 %v2479, %v2507
    %v2509 = vand.u32 %v2508, 4294901760
    %v2510 = vsub.f32 %v2508, %v2509
    %v2511 = vand.u32 %v2510, 4294901760
    %2512 = vmatmul.f32.gmra.mxu0 %v2511
    %v2513 = vpop.f32.mrf.mxu0
    %v2514 = vadd.f32 0.0, %v2513
    %2515 = vdwg.mxu0
    %2516 = vmatpush.msra.mxu0 0.0
    %2517 = vmatpush.msra.mxu0 0.0
    %2518 = vmatpush.msra.mxu0 0.0
    %2519 = vmatpush.msra.mxu0 0.0
    %2520 = vmatpush.msra.mxu0 0.0
    %2521 = vmatpush.msra.mxu0 0.0
    %2522 = vmatpush.msra.mxu0 0.0
    %2523 = vmatpush.msra.mxu0 0.0
    %2524 = vmatpush.msra.mxu0 0.0
    %2525 = vmatpush.msra.mxu0 0.0
    %2526 = vmatpush.msra.mxu0 0.0
    %2527 = vmatpush.msra.mxu0 0.0
    %2528 = vmatpush.msra.mxu0 0.0
    %2529 = vmatpush.msra.mxu0 0.0
    %v2530 = vand.u32 %v1840, 4294901760
    %v2531 = vsub.f32 %v1840, %v2530
    %v2532 = vand.u32 %v2531, 4294901760
    %v2533 = vsub.f32 %v2531, %v2532
    %v2534 = vand.u32 %v2533, 4294901760
    %2535 = vmatpush.msra.mxu0 %v2534
    %v2536 = vand.u32 %v1838, 4294901760
    %v2537 = vsub.f32 %v1838, %v2536
    %v2538 = vand.u32 %v2537, 4294901760
    %v2539 = vsub.f32 %v2537, %v2538
    %v2540 = vand.u32 %v2539, 4294901760
    %2541 = vmatpush.msra.mxu0 %v2540
    %v2542 = vand.u32 %v2476, 4294901760
    %2543 = vmatmul.f32.gmra.mxu0 %v2542
    %v2544 = vpop.f32.mrf.mxu0
    %v2545 = vadd.f32 %v2506, %v2544
    %v2546 = vand.u32 %v2479, 4294901760
    %2547 = vmatmul.f32.gmra.mxu0 %v2546
    %v2548 = vpop.f32.mrf.mxu0
    %v2549 = vadd.f32 %v2514, %v2548
    %2550 = vdwg.mxu0
    %2551 = vmatpush.msra.mxu0 0.0
    %2552 = vmatpush.msra.mxu0 0.0
    %2553 = vmatpush.msra.mxu0 0.0
    %2554 = vmatpush.msra.mxu0 0.0
    %2555 = vmatpush.msra.mxu0 0.0
    %2556 = vmatpush.msra.mxu0 0.0
    %2557 = vmatpush.msra.mxu0 0.0
    %2558 = vmatpush.msra.mxu0 0.0
    %2559 = vmatpush.msra.mxu0 0.0
    %2560 = vmatpush.msra.mxu0 0.0
    %2561 = vmatpush.msra.mxu0 0.0
    %2562 = vmatpush.msra.mxu0 0.0
    %2563 = vmatpush.msra.mxu0 0.0
    %2564 = vmatpush.msra.mxu0 0.0
    %v2565 = vand.u32 %v1840, 4294901760
    %v2566 = vsub.f32 %v1840, %v2565
    %2567 = vmatpush.msra.mxu0 %v2566
    %v2568 = vand.u32 %v1838, 4294901760
    %v2569 = vsub.f32 %v1838, %v2568
    %2570 = vmatpush.msra.mxu0 %v2569
    %v2571 = vand.u32 %v2476, 4294901760
    %v2572 = vsub.f32 %v2476, %v2571
    %2573 = vmatmul.f32.gmra.mxu0 %v2572
    %v2574 = vpop.f32.mrf.mxu0
    %v2575 = vadd.f32 %v2545, %v2574
    %v2576 = vand.u32 %v2479, 4294901760
    %v2577 = vsub.f32 %v2479, %v2576
    %2578 = vmatmul.f32.gmra.mxu0 %v2577
    %v2579 = vpop.f32.mrf.mxu0
    %v2580 = vadd.f32 %v2549, %v2579
    %2581 = vdwg.mxu0
    %2582 = vmatpush.msra.mxu0 0.0
    %2583 = vmatpush.msra.mxu0 0.0
    %2584 = vmatpush.msra.mxu0 0.0
    %2585 = vmatpush.msra.mxu0 0.0
    %2586 = vmatpush.msra.mxu0 0.0
    %2587 = vmatpush.msra.mxu0 0.0
    %2588 = vmatpush.msra.mxu0 0.0
    %2589 = vmatpush.msra.mxu0 0.0
    %2590 = vmatpush.msra.mxu0 0.0
    %2591 = vmatpush.msra.mxu0 0.0
    %2592 = vmatpush.msra.mxu0 0.0
    %2593 = vmatpush.msra.mxu0 0.0
    %2594 = vmatpush.msra.mxu0 0.0
    %2595 = vmatpush.msra.mxu0 0.0
    %v2596 = vand.u32 %v1840, 4294901760
    %2597 = vmatpush.msra.mxu0 %v2596
    %v2598 = vand.u32 %v1838, 4294901760
    %2599 = vmatpush.msra.mxu0 %v2598
    %v2600 = vand.u32 %v2476, 4294901760
    %v2601 = vsub.f32 %v2476, %v2600
    %v2602 = vand.u32 %v2601, 4294901760
    %2603 = vmatmul.f32.gmra.mxu0 %v2602
    %v2604 = vpop.f32.mrf.mxu0
    %v2605 = vadd.f32 %v2575, %v2604
    %v2606 = vand.u32 %v2479, 4294901760
    %v2607 = vsub.f32 %v2479, %v2606
    %v2608 = vand.u32 %v2607, 4294901760
    %2609 = vmatmul.f32.gmra.mxu0 %v2608
    %v2610 = vpop.f32.mrf.mxu0
    %v2611 = vadd.f32 %v2580, %v2610
    %2612 = vdwg.mxu0
    %2613 = vmatpush.msra.mxu0 0.0
    %2614 = vmatpush.msra.mxu0 0.0
    %2615 = vmatpush.msra.mxu0 0.0
    %2616 = vmatpush.msra.mxu0 0.0
    %2617 = vmatpush.msra.mxu0 0.0
    %2618 = vmatpush.msra.mxu0 0.0
    %2619 = vmatpush.msra.mxu0 0.0
    %2620 = vmatpush.msra.mxu0 0.0
    %2621 = vmatpush.msra.mxu0 0.0
    %2622 = vmatpush.msra.mxu0 0.0
    %2623 = vmatpush.msra.mxu0 0.0
    %2624 = vmatpush.msra.mxu0 0.0
    %2625 = vmatpush.msra.mxu0 0.0
    %2626 = vmatpush.msra.mxu0 0.0
    %v2627 = vand.u32 %v1840, 4294901760
    %v2628 = vsub.f32 %v1840, %v2627
    %v2629 = vand.u32 %v2628, 4294901760
    %2630 = vmatpush.msra.mxu0 %v2629
    %v2631 = vand.u32 %v1838, 4294901760
    %v2632 = vsub.f32 %v1838, %v2631
    %v2633 = vand.u32 %v2632, 4294901760
    %2634 = vmatpush.msra.mxu0 %v2633
    %v2635 = vand.u32 %v2476, 4294901760
    %2636 = vmatmul.f32.gmra.mxu0 %v2635
    %v2637 = vpop.f32.mrf.mxu0
    %v2638 = vadd.f32 %v2605, %v2637
    %v2639 = vand.u32 %v2479, 4294901760
    %2640 = vmatmul.f32.gmra.mxu0 %v2639
    %v2641 = vpop.f32.mrf.mxu0
    %v2642 = vadd.f32 %v2611, %v2641
    %2643 = vdwg.mxu0
    %2644 = vmatpush.msra.mxu0 0.0
    %2645 = vmatpush.msra.mxu0 0.0
    %2646 = vmatpush.msra.mxu0 0.0
    %2647 = vmatpush.msra.mxu0 0.0
    %2648 = vmatpush.msra.mxu0 0.0
    %2649 = vmatpush.msra.mxu0 0.0
    %2650 = vmatpush.msra.mxu0 0.0
    %2651 = vmatpush.msra.mxu0 0.0
    %2652 = vmatpush.msra.mxu0 0.0
    %2653 = vmatpush.msra.mxu0 0.0
    %2654 = vmatpush.msra.mxu0 0.0
    %2655 = vmatpush.msra.mxu0 0.0
    %2656 = vmatpush.msra.mxu0 0.0
    %2657 = vmatpush.msra.mxu0 0.0
    %v2658 = vand.u32 %v1840, 4294901760
    %2659 = vmatpush.msra.mxu0 %v2658
    %v2660 = vand.u32 %v1838, 4294901760
    %2661 = vmatpush.msra.mxu0 %v2660
    %v2662 = vand.u32 %v2476, 4294901760
    %2663 = vmatmul.f32.gmra.mxu0 %v2662
    %v2664 = vpop.f32.mrf.mxu0
    %v2665 = vadd.f32 %v2638, %v2664
    %v2666 = vand.u32 %v2479, 4294901760
    %2667 = vmatmul.f32.gmra.mxu0 %v2666
    %v2668 = vpop.f32.mrf.mxu0
    %v2669 = vadd.f32 %v2642, %v2668
    %2670 = vdwg.mxu0
    %v2671 = vld [vmem:[%s3 + $0x18] sm:$0xff]
    %v2673 = vsel %vm311, %v2665, 0
    %v2676 = vsel %vm311, %v2669, 0
    %2678 = vmatpush.msra.mxu0 0.0
    %2679 = vmatpush.msra.mxu0 0.0
    %2680 = vmatpush.msra.mxu0 0.0
    %2681 = vmatpush.msra.mxu0 0.0
    %2682 = vmatpush.msra.mxu0 0.0
    %2683 = vmatpush.msra.mxu0 0.0
    %2684 = vmatpush.msra.mxu0 0.0
    %2685 = vmatpush.msra.mxu0 0.0
    %2686 = vmatpush.msra.mxu0 0.0
    %2687 = vmatpush.msra.mxu0 0.0
    %2688 = vmatpush.msra.mxu0 0.0
    %2689 = vmatpush.msra.mxu0 0.0
    %2690 = vmatpush.msra.mxu0 0.0
    %2691 = vmatpush.msra.mxu0 0.0
    %2692 = vmatpush.msra.mxu0 0.0
    %v2693 = vand.u32 %v2671, 4294901760
    %2694 = vmatpush.msra.mxu0 %v2693
    %v2695 = vand.u32 %v2673, 4294901760
    %v2696 = vsub.f32 %v2673, %v2695
    %v2697 = vand.u32 %v2696, 4294901760
    %v2698 = vsub.f32 %v2696, %v2697
    %v2699 = vand.u32 %v2698, 4294901760
    %2700 = vmatmul.f32.gmra.mxu0 %v2699
    %v2701 = vpop.f32.mrf.mxu0
    %v2702 = vadd.f32 0.0, %v2701
    %v2703 = vand.u32 %v2676, 4294901760
    %v2704 = vsub.f32 %v2676, %v2703
    %v2705 = vand.u32 %v2704, 4294901760
    %v2706 = vsub.f32 %v2704, %v2705
    %v2707 = vand.u32 %v2706, 4294901760
    %2708 = vmatmul.f32.gmra.mxu0 %v2707
    %v2709 = vpop.f32.mrf.mxu0
    %v2710 = vadd.f32 0.0, %v2709
    %2711 = vdwg.mxu0
    %2712 = vmatpush.msra.mxu0 0.0
    %2713 = vmatpush.msra.mxu0 0.0
    %2714 = vmatpush.msra.mxu0 0.0
    %2715 = vmatpush.msra.mxu0 0.0
    %2716 = vmatpush.msra.mxu0 0.0
    %2717 = vmatpush.msra.mxu0 0.0
    %2718 = vmatpush.msra.mxu0 0.0
    %2719 = vmatpush.msra.mxu0 0.0
    %2720 = vmatpush.msra.mxu0 0.0
    %2721 = vmatpush.msra.mxu0 0.0
    %2722 = vmatpush.msra.mxu0 0.0
    %2723 = vmatpush.msra.mxu0 0.0
    %2724 = vmatpush.msra.mxu0 0.0
    %2725 = vmatpush.msra.mxu0 0.0
    %2726 = vmatpush.msra.mxu0 0.0
    %v2727 = vand.u32 %v2671, 4294901760
    %v2728 = vsub.f32 %v2671, %v2727
    %v2729 = vand.u32 %v2728, 4294901760
    %v2730 = vsub.f32 %v2728, %v2729
    %v2731 = vand.u32 %v2730, 4294901760
    %2732 = vmatpush.msra.mxu0 %v2731
    %v2733 = vand.u32 %v2673, 4294901760
    %2734 = vmatmul.f32.gmra.mxu0 %v2733
    %v2735 = vpop.f32.mrf.mxu0
    %v2736 = vadd.f32 %v2702, %v2735
    %v2737 = vand.u32 %v2676, 4294901760
    %2738 = vmatmul.f32.gmra.mxu0 %v2737
    %v2739 = vpop.f32.mrf.mxu0
    %v2740 = vadd.f32 %v2710, %v2739
    %2741 = vdwg.mxu0
    %2742 = vmatpush.msra.mxu0 0.0
    %2743 = vmatpush.msra.mxu0 0.0
    %2744 = vmatpush.msra.mxu0 0.0
    %2745 = vmatpush.msra.mxu0 0.0
    %2746 = vmatpush.msra.mxu0 0.0
    %2747 = vmatpush.msra.mxu0 0.0
    %2748 = vmatpush.msra.mxu0 0.0
    %2749 = vmatpush.msra.mxu0 0.0
    %2750 = vmatpush.msra.mxu0 0.0
    %2751 = vmatpush.msra.mxu0 0.0
    %2752 = vmatpush.msra.mxu0 0.0
    %2753 = vmatpush.msra.mxu0 0.0
    %2754 = vmatpush.msra.mxu0 0.0
    %2755 = vmatpush.msra.mxu0 0.0
    %2756 = vmatpush.msra.mxu0 0.0
    %v2757 = vand.u32 %v2671, 4294901760
    %v2758 = vsub.f32 %v2671, %v2757
    %2759 = vmatpush.msra.mxu0 %v2758
    %v2760 = vand.u32 %v2673, 4294901760
    %v2761 = vsub.f32 %v2673, %v2760
    %2762 = vmatmul.f32.gmra.mxu0 %v2761
    %v2763 = vpop.f32.mrf.mxu0
    %v2764 = vadd.f32 %v2736, %v2763
    %v2765 = vand.u32 %v2676, 4294901760
    %v2766 = vsub.f32 %v2676, %v2765
    %2767 = vmatmul.f32.gmra.mxu0 %v2766
    %v2768 = vpop.f32.mrf.mxu0
    %v2769 = vadd.f32 %v2740, %v2768
    %2770 = vdwg.mxu0
    %2771 = vmatpush.msra.mxu0 0.0
    %2772 = vmatpush.msra.mxu0 0.0
    %2773 = vmatpush.msra.mxu0 0.0
    %2774 = vmatpush.msra.mxu0 0.0
    %2775 = vmatpush.msra.mxu0 0.0
    %2776 = vmatpush.msra.mxu0 0.0
    %2777 = vmatpush.msra.mxu0 0.0
    %2778 = vmatpush.msra.mxu0 0.0
    %2779 = vmatpush.msra.mxu0 0.0
    %2780 = vmatpush.msra.mxu0 0.0
    %2781 = vmatpush.msra.mxu0 0.0
    %2782 = vmatpush.msra.mxu0 0.0
    %2783 = vmatpush.msra.mxu0 0.0
    %2784 = vmatpush.msra.mxu0 0.0
    %2785 = vmatpush.msra.mxu0 0.0
    %v2786 = vand.u32 %v2671, 4294901760
    %2787 = vmatpush.msra.mxu0 %v2786
    %v2788 = vand.u32 %v2673, 4294901760
    %v2789 = vsub.f32 %v2673, %v2788
    %v2790 = vand.u32 %v2789, 4294901760
    %2791 = vmatmul.f32.gmra.mxu0 %v2790
    %v2792 = vpop.f32.mrf.mxu0
    %v2793 = vadd.f32 %v2764, %v2792
    %v2794 = vand.u32 %v2676, 4294901760
    %v2795 = vsub.f32 %v2676, %v2794
    %v2796 = vand.u32 %v2795, 4294901760
    %2797 = vmatmul.f32.gmra.mxu0 %v2796
    %v2798 = vpop.f32.mrf.mxu0
    %v2799 = vadd.f32 %v2769, %v2798
    %2800 = vdwg.mxu0
    %2801 = vmatpush.msra.mxu0 0.0
    %2802 = vmatpush.msra.mxu0 0.0
    %2803 = vmatpush.msra.mxu0 0.0
    %2804 = vmatpush.msra.mxu0 0.0
    %2805 = vmatpush.msra.mxu0 0.0
    %2806 = vmatpush.msra.mxu0 0.0
    %2807 = vmatpush.msra.mxu0 0.0
    %2808 = vmatpush.msra.mxu0 0.0
    %2809 = vmatpush.msra.mxu0 0.0
    %2810 = vmatpush.msra.mxu0 0.0
    %2811 = vmatpush.msra.mxu0 0.0
    %2812 = vmatpush.msra.mxu0 0.0
    %2813 = vmatpush.msra.mxu0 0.0
    %2814 = vmatpush.msra.mxu0 0.0
    %2815 = vmatpush.msra.mxu0 0.0
    %v2816 = vand.u32 %v2671, 4294901760
    %v2817 = vsub.f32 %v2671, %v2816
    %v2818 = vand.u32 %v2817, 4294901760
    %2819 = vmatpush.msra.mxu0 %v2818
    %v2820 = vand.u32 %v2673, 4294901760
    %2821 = vmatmul.f32.gmra.mxu0 %v2820
    %v2822 = vpop.f32.mrf.mxu0
    %v2823 = vadd.f32 %v2793, %v2822
    %v2824 = vand.u32 %v2676, 4294901760
    %2825 = vmatmul.f32.gmra.mxu0 %v2824
    %v2826 = vpop.f32.mrf.mxu0
    %v2827 = vadd.f32 %v2799, %v2826
    %2828 = vdwg.mxu0
    %2829 = vmatpush.msra.mxu0 0.0
    %2830 = vmatpush.msra.mxu0 0.0
    %2831 = vmatpush.msra.mxu0 0.0
    %2832 = vmatpush.msra.mxu0 0.0
    %2833 = vmatpush.msra.mxu0 0.0
    %2834 = vmatpush.msra.mxu0 0.0
    %2835 = vmatpush.msra.mxu0 0.0
    %2836 = vmatpush.msra.mxu0 0.0
    %2837 = vmatpush.msra.mxu0 0.0
    %2838 = vmatpush.msra.mxu0 0.0
    %2839 = vmatpush.msra.mxu0 0.0
    %2840 = vmatpush.msra.mxu0 0.0
    %2841 = vmatpush.msra.mxu0 0.0
    %2842 = vmatpush.msra.mxu0 0.0
    %2843 = vmatpush.msra.mxu0 0.0
    %v2844 = vand.u32 %v2671, 4294901760
    %2845 = vmatpush.msra.mxu0 %v2844
    %v2846 = vand.u32 %v2673, 4294901760
    %2847 = vmatmul.f32.gmra.mxu0 %v2846
    %v2848 = vpop.f32.mrf.mxu0
    %v2849 = vadd.f32 %v2823, %v2848
    %v2850 = vand.u32 %v2676, 4294901760
    %2851 = vmatmul.f32.gmra.mxu0 %v2850
    %v2852 = vpop.f32.mrf.mxu0
    %v2853 = vadd.f32 %v2827, %v2852
    %2854 = vdwg.mxu0
    %v2855 = vadd.f32 %v2223, %v2849
    %v2856 = vadd.f32 %v2224, %v2853
    %2857 = vst.msk [vmem:[#allocation6] sm:$0xff] %vm31, %v2855
    %2858 = vst.msk [vmem:[#allocation6 + $0x8] sm:$0xff] %vm31, %v2856
    %v2859 = vadd.f32 %v25, %v2855
    %v2860 = vadd.f32 %v26, %v2856
    %2861 = vst.msk [vmem:[#allocation2] sm:$0xff] %vm31, %v2859
    %2862 = vst.msk [vmem:[#allocation2 + $0x8] sm:$0xff] %vm31, %v2860
    // Predicated region
    $region22: #{suma_decoder_layer.1} parent=1 // pred_check
      _
    $region23: #{suma_decoder_layer.1} parent=1 // pred_check_branch
      %2864 = sbr.rel (0) target = $region25
    $region24: #{suma_decoder_layer.1} parent=1 // pred_region
      %2866 = vsyncadd [#allocation3], 0
      %s2867 = sshll.u32 [#allocation2], 4
      %s2868 = int_to_ptr.vmem [resolvable:$true] %s2867
      %s2869 = sshll.u32 %s5, 4
      %s2870 = int_to_ptr.hbm [resolvable:$true] %s2869
      %2875 = dma.vmem_to_hbm [thread:$0]  %s2868, 256, %s2870, [#allocation3], 128, 128, 8
    $region25: #{suma_decoder_layer.1} parent=1 // pred_fallthru
      _
    // Predicated region
    $region26: #{suma_decoder_layer.1} parent=1 // pred_check
      _
    $region27: #{suma_decoder_layer.1} parent=1 // pred_check_branch
      %2877 = sbr.rel (0) target = $region29
    $region28: #{suma_decoder_layer.1} parent=1 // pred_region
      %2879 = vsyncadd [#allocation5], 0
      %s2880 = sshll.u32 [#allocation4], 4
      %s2881 = int_to_ptr.vmem [resolvable:$true] %s2880
      %s2882 = sshll.u32 %s6, 4
      %s2883 = int_to_ptr.hbm [resolvable:$true] %s2882
      %2888 = dma.vmem_to_hbm [thread:$0]  %s2881, 256, %s2883, [#allocation5], 128, 128, 8
    $region29: #{suma_decoder_layer.1} parent=1 // pred_fallthru
      _
    // Predicated region
    $region30: #{suma_decoder_layer.1} parent=1 // pred_check
      _
    $region31: #{suma_decoder_layer.1} parent=1 // pred_check_branch
      %2890 = sbr.rel (0) target = $region33
    $region32: #{suma_decoder_layer.1} parent=1 // pred_region
      %2892 = vsyncadd [#allocation5], 0
      %s2893 = sshll.u32 [#allocation6], 4
      %s2894 = int_to_ptr.vmem [resolvable:$true] %s2893
      %s2895 = sshll.u32 %s7, 4
      %s2896 = int_to_ptr.hbm [resolvable:$true] %s2895
      %2901 = dma.vmem_to_hbm [thread:$0]  %s2894, 256, %s2896, [#allocation5], 128, 128, 8
    $region33: #{suma_decoder_layer.1} parent=1 // pred_fallthru
      _
    // Predicated region
    $region34: #{suma_decoder_layer.1} parent=1 // pred_check
      _
    $region35: #{suma_decoder_layer.1} parent=1 // pred_check_branch
      %2903 = sbr.rel (0) target = $region37
    $region36: #{suma_decoder_layer.1} parent=1 // pred_region
      %2905 = dma.done [#allocation3], 256
    $region37: #{suma_decoder_layer.1} parent=1 // pred_fallthru
      _
    // Predicated region
    $region38: #{suma_decoder_layer.1} parent=1 // pred_check
      _
    $region39: #{suma_decoder_layer.1} parent=1 // pred_check_branch
      %2907 = sbr.rel (0) target = $region41
    $region40: #{suma_decoder_layer.1} parent=1 // pred_region
      %2909 = dma.done [#allocation5], 256
    $region41: #{suma_decoder_layer.1} parent=1 // pred_fallthru
      _
    // Predicated region
    $region42: #{suma_decoder_layer.1} parent=1 // pred_check
      _
    $region43: #{suma_decoder_layer.1} parent=1 // pred_check_branch
      %2911 = sbr.rel (0) target = $region45
    $region44: #{suma_decoder_layer.1} parent=1 // pred_region
      %2913 = dma.done [#allocation5], 256
    $region45: #{suma_decoder_layer.1} parent=1 // pred_fallthru
      _
    %2914 = vsyncpa [#allocation3], 1
    %2915 = vsyncpa [#allocation5], 1

</llo_original>
